<compile_context>
chip_gen: v7x
topology: tpu7x:2x2x1
jax: 0.10.0
libtpu: 0.0.40
codegen_flags: <defaults>
</compile_context>

<pallas_src>
import functools
import math

import jax
import jax.numpy as jnp
from jax import lax
from jax.experimental import pallas as pl
from jax.experimental.pallas import tpu as pltpu


def _pam_flash_kernel(q_ref, k_ref, v_ref, x_ref, gamma_ref, out_ref,
                      kpad_scr, m_scr, l_scr, acc_scr,
                      *, cq_r, n_valid, needs_mask):
    # q_ref:   (tq, cq_pad)  bf16 query tile (resident across the kv axis)
    # k_ref:   (cq_r, tk)    bf16 key tile (streamed along the kv axis)
    # v_ref:   (C, tk)       bf16 value tile (streamed along the kv axis)
    # x_ref:   (C, tq)       residual input tile (original dtype)
    # gamma_ref: (1, 1) scalar in SMEM
    # out_ref: (C, tq)
    ki = pl.program_id(2)
    cq_pad, tk = kpad_scr.shape

    @pl.when(ki == 0)
    def _init():
        # Zero the padded key rows once per q-tile (rows [cq_r:] never get
        # overwritten below, so they stay zero for every kv step).
        if cq_pad > cq_r:
            kpad_scr[cq_r:, :] = jnp.zeros((cq_pad - cq_r, tk), kpad_scr.dtype)
        m_scr[...] = jnp.full(m_scr.shape, -jnp.inf, dtype=m_scr.dtype)
        l_scr[...] = jnp.zeros(l_scr.shape, dtype=l_scr.dtype)
        acc_scr[...] = jnp.zeros(acc_scr.shape, dtype=acc_scr.dtype)

    # Stage the narrow key tile into the lane/contraction-padded buffer so the
    # energy matmul is a dense (tq, cq_pad) @ (cq_pad, tk) MXU op while the
    # HBM stream stays at the cheap cq_r width.
    kpad_scr[:cq_r, :] = k_ref[...]

    # Energy tile: (tq, tk), f32 accumulation, bf16 operands.
    s = jnp.dot(q_ref[...], kpad_scr[...], preferred_element_type=jnp.float32)

    if needs_mask:  # static python flag: compiled out when N divides the tiles
        col = ki * tk + lax.broadcasted_iota(jnp.int32, s.shape, 1)
        s = jnp.where(col < n_valid, s, -jnp.inf)

    # Online softmax over the kv axis (all stats in f32).
    m_prev = m_scr[...]
    m_new = jnp.maximum(m_prev, jnp.max(s, axis=-1, keepdims=True))
    alpha = jnp.exp(m_prev - m_new)
    p = jnp.exp(s - m_new)
    l_scr[...] = alpha * l_scr[...] + jnp.sum(p, axis=-1, keepdims=True)
    # acc (tq, C) += p (tq, tk) . v (C, tk) -- transposed-RHS contraction,
    # consumed natively by the MXU (no explicit v transpose).
    pv = lax.dot_general(p.astype(v_ref.dtype), v_ref[...],
                         dimension_numbers=(((1,), (1,)), ((), ())),
                         preferred_element_type=jnp.float32)
    acc_scr[...] = alpha * acc_scr[...] + pv
    m_scr[...] = m_new

    @pl.when(ki == pl.num_programs(2) - 1)
    def _finalize():
        # Exact normalization (runs once per q-tile -> effectively free),
        # transpose back to channels-first, scale by gamma, add residual.
        inv_l = 1.0 / l_scr[...]                  # (tq, 1) exact divide
        o = acc_scr[...] * inv_l                  # (tq, C) f32
        gamma = gamma_ref[0, 0]
        out_ref[...] = (gamma * jnp.transpose(o)
                        + x_ref[...].astype(jnp.float32)).astype(out_ref.dtype)


def pam_forward(x_nchw, wq, bq, wk, bk, wv, bv, gamma, *, tq=256, tk=256,
                compute_dtype=jnp.bfloat16, kv_buffers=2):
    """PAM_Module forward.

    x_nchw: (B, C, H, W); wq/wk: (C, C//8); wv: (C, C); biases (1, C_out);
    gamma (1, 1).  Returns (B, C, H, W) like the PyTorch module.
    """
    B, C, H, W = x_nchw.shape
    N = H * W
    Cq = wq.shape[1]
    out_dtype = x_nchw.dtype

    # ---- tile sizes: lane-aligned multiples of 128, clamped for tiny N -----
    n128 = pl.cdiv(N, 128) * 128
    tq = max(128, min(tq, n128))
    tk = max(128, min(tk, n128))
    assert tq % 128 == 0 and tk % 128 == 0, "tile sizes must be multiples of 128"

    step = (tq * tk) // math.gcd(tq, tk)
    n_pad = pl.cdiv(N, step) * step
    needs_mask = n_pad != N

    cq_r = pl.cdiv(Cq, 16) * 16                      # packing-aligned key rows
    cq_pad = max(128, pl.cdiv(cq_r, 128) * 128)      # lane-dense query width

    # ---- 1x1-conv projections: one-time XLA matmuls (HIGHEST precision),
    #      then cast to bf16 for the MXU-side attention matmuls. -------------
    hp = lax.Precision.HIGHEST
    x_cn = x_nchw.reshape(B, C, N)                   # free reshape of NCHW
    xf = x_cn.astype(jnp.float32)

    q = jnp.einsum("bcn,cf->bnf", xf, wq.astype(jnp.float32), precision=hp)
    q = q + bq.reshape(1, 1, Cq).astype(jnp.float32)                 # (B, N, Cq)

    kv_w = jnp.concatenate([wk.astype(jnp.float32), wv.astype(jnp.float32)], axis=1)
    kv_b = jnp.concatenate([bk.reshape(-1), bv.reshape(-1)]).astype(jnp.float32)
    kvp = jnp.einsum("cf,bcn->bfn", kv_w, xf, precision=hp) + kv_b[None, :, None]
    k = kvp[:, :Cq, :]                                                # (B, Cq, N)
    v = kvp[:, Cq:, :]                                                # (B, C,  N)

    # ---- zero-pad to tile-friendly shapes (zero pads contribute exactly 0 to
    #      the energy; padded kv columns are masked in-kernel). --------------
    q = jnp.pad(q.astype(compute_dtype),
                ((0, 0), (0, n_pad - N), (0, cq_pad - Cq)))           # (B, n_pad, cq_pad)
    k = jnp.pad(k.astype(compute_dtype),
                ((0, 0), (0, cq_r - Cq), (0, n_pad - N)))             # (B, cq_r, n_pad)
    v = jnp.pad(v.astype(compute_dtype), ((0, 0), (0, 0), (0, n_pad - N)))
    x_res = jnp.pad(x_cn, ((0, 0), (0, 0), (0, n_pad - N)))
    gamma_smem = jnp.asarray(gamma, jnp.float32).reshape(1, 1)

    grid = (B, n_pad // tq, n_pad // tk)

    # Optional deeper buffering for the streamed K/V (e.g. v5e, if the K/V DMA
    # becomes exposed once per-step compute shrinks).  Default (2) keeps the
    # standard double-buffered pipeline.
    kv_pipe = {} if kv_buffers == 2 else {"pipeline_mode": pl.Buffered(kv_buffers)}

    out_cn = pl.pallas_call(
        functools.partial(_pam_flash_kernel, cq_r=cq_r, n_valid=N,
                          needs_mask=needs_mask),
        out_shape=jax.ShapeDtypeStruct((B, C, n_pad), out_dtype),
        grid=grid,
        in_specs=[
            pl.BlockSpec((None, tq, cq_pad), lambda b, qi, ki: (b, qi, 0)),      # Q
            pl.BlockSpec((None, cq_r, tk), lambda b, qi, ki: (b, 0, ki), **kv_pipe),  # K
            pl.BlockSpec((None, C, tk), lambda b, qi, ki: (b, 0, ki), **kv_pipe),     # V
            pl.BlockSpec((None, C, tq), lambda b, qi, ki: (b, 0, qi)),           # x (residual)
            pl.BlockSpec(memory_space=pltpu.MemorySpace.SMEM),                   # gamma
        ],
        out_specs=pl.BlockSpec((None, C, tq), lambda b, qi, ki: (b, 0, qi)),
        scratch_shapes=[
            pltpu.VMEM((cq_pad, tk), compute_dtype),   # zero-padded key tile
            pltpu.VMEM((tq, 1), jnp.float32),          # online-softmax running max
            pltpu.VMEM((tq, 1), jnp.float32),          # online-softmax running sum
            pltpu.VMEM((tq, C), jnp.float32),          # output accumulator
        ],
        compiler_params=pltpu.CompilerParams(
            dimension_semantics=("parallel", "parallel", "arbitrary")),
    )(q, k, v, x_res, gamma_smem)

    return out_cn[:, :, :N].reshape(B, C, H, W)


def pam_reference(x_nchw, wq, bq, wk, bk, wv, bv, gamma):
    """Pure-JAX reference mirroring the PyTorch forward exactly (f32, HIGHEST)."""
    B, C, H, W = x_nchw.shape
    N = H * W
    hp = lax.Precision.HIGHEST
    x = x_nchw.reshape(B, C, N).astype(jnp.float32)                  # (B, C, N)
    q = jnp.einsum("bcn,cd->bdn", x, wq, precision=hp) + bq.T[None]  # (B, Cq, N)
    k = jnp.einsum("bcn,cd->bdn", x, wk, precision=hp) + bk.T[None]  # (B, Cq, N)
    v = jnp.einsum("bcn,cd->bdn", x, wv, precision=hp) + bv.T[None]  # (B, C, N)
    energy = jnp.einsum("bdi,bdj->bij", q, k, precision=hp)          # (B, N, N)
    attn = jax.nn.softmax(energy, axis=-1)
    out = jnp.einsum("bcj,bij->bci", v, attn, precision=hp)          # (B, C, N)
    out = gamma[0, 0] * out + x
    return out.reshape(B, C, H, W).astype(x_nchw.dtype)


if __name__ == "__main__":
    key = jax.random.PRNGKey(0)
    # in_dim = 128 -> query/key dim = 16; N = 512 -> 2 q-tiles x 2 kv-tiles of
    # 256, so the online-softmax accumulation across kv steps is exercised.
    B, C, H, W = 2, 128, 16, 32
    Cq = C // 8

    kx, kq, kk, kv_, kx2 = jax.random.split(key, 5)
    x = jax.random.normal(kx, (B, C, H, W), dtype=jnp.float32)
    wq = jax.random.normal(kq, (C, Cq), dtype=jnp.float32) * 0.05
    wk = jax.random.normal(kk, (C, Cq), dtype=jnp.float32) * 0.05
    wv = jax.random.normal(kv_, (C, C), dtype=jnp.float32) * 0.05
    bq = jnp.linspace(-0.1, 0.1, Cq, dtype=jnp.float32).reshape(1, Cq)
    bk = jnp.linspace(0.1, -0.1, Cq, dtype=jnp.float32).reshape(1, Cq)
    bv = jnp.linspace(-0.05, 0.05, C, dtype=jnp.float32).reshape(1, C)
    # PyTorch initializes gamma to zero; use a nonzero value so the attention
    # path is exercised end-to-end while staying deterministic.
    gamma = jnp.array([[0.5]], dtype=jnp.float32)

    out = jax.block_until_ready(pam_forward(x, wq, bq, wk, bk, wv, bv, gamma))
    ref = pam_reference(x, wq, bq, wk, bk, wv, bv, gamma)
    assert out.shape == (B, C, H, W)
    # Softmax normalization is now exact; the residual error budget is the
    # bf16 MXU operands (requested by the perf review) vs the f32 HIGHEST ref.
    err = float(jnp.max(jnp.abs(out - ref)))
    assert jnp.allclose(out, ref, atol=1e-2, rtol=1e-2), f"mismatch vs ref: {err}"

    # Ragged spatial size (H*W not a multiple of the tiles): exercises the
    # in-kernel kv-column masking / padded-N path.
    H2, W2 = 16, 20                                  # N = 320 -> padded to 512
    x2 = jax.random.normal(kx2, (B, C, H2, W2), dtype=jnp.float32)
    out2 = jax.block_until_ready(pam_forward(x2, wq, bq, wk, bk, wv, bv, gamma))
    ref2 = pam_reference(x2, wq, bq, wk, bk, wv, bv, gamma)
    assert out2.shape == (B, C, H2, W2)
    err2 = float(jnp.max(jnp.abs(out2 - ref2)))
    assert jnp.allclose(out2, ref2, atol=1e-2, rtol=1e-2), f"ragged mismatch: {err2}"

    print("KERNEL_OK")
</pallas_src>

<mosaic_0001>
module attributes {stable_mosaic.version = 11 : i64} {
  func.func @_pam_flash_kernel(%arg0: i32, %arg1: i32, %arg2: i32, %arg3: memref<1x256x128xbf16, #tpu.memory_space<vmem>>, %arg4: memref<1x16x256xbf16, #tpu.memory_space<vmem>>, %arg5: memref<1x128x256xbf16, #tpu.memory_space<vmem>>, %arg6: memref<1x128x256xf32, #tpu.memory_space<vmem>>, %arg7: memref<1x1xf32, #tpu.memory_space<smem>>, %arg8: memref<1x128x256xf32, #tpu.memory_space<vmem>>, %arg9: memref<128x256xbf16, #tpu.memory_space<vmem>>, %arg10: memref<256x1xf32, #tpu.memory_space<vmem>>, %arg11: memref<256x1xf32, #tpu.memory_space<vmem>>, %arg12: memref<256x128xf32, #tpu.memory_space<vmem>>) attributes {dimension_semantics = [#tpu.dimension_semantics<parallel>, #tpu.dimension_semantics<parallel>, #tpu.dimension_semantics<arbitrary>], iteration_bounds = array<i64: 2, 2, 2>, scalar_prefetch = 0 : i64, scratch_operands = 4 : i64, tpu.core_type = #tpu.core_type<tc>, window_params = [{transform_indices = @transform_0, window_bounds = array<i64: 1, 256, 128>}, {transform_indices = @transform_1, window_bounds = array<i64: 1, 16, 256>}, {transform_indices = @transform_2, window_bounds = array<i64: 1, 128, 256>}, {transform_indices = @transform_3, window_bounds = array<i64: 1, 128, 256>}, {transform_indices = @transform_4, window_bounds = array<i64: 1, 1>}, {transform_indices = @transform_5, window_bounds = array<i64: 1, 128, 256>}]} {
    %c0_i32 = arith.constant 0 : i32
    %0 = arith.cmpi eq, %arg2, %c0_i32 : i32
    %1 = arith.extui %0 : i1 to i32
    %c0_i32_0 = arith.constant 0 : i32
    %2 = arith.cmpi ne, %1, %c0_i32_0 : i32
    scf.if %2 {
      %cst_29 = arith.constant 0.000000e+00 : bf16
      %38 = vector.broadcast %cst_29 : bf16 to vector<112x256xbf16>
      %c16 = arith.constant 16 : index
      %c0_30 = arith.constant 0 : index
      %39 = vector.load %arg9[%c16, %c0_30] : memref<128x256xbf16, #tpu.memory_space<vmem>>, vector<112x256xbf16>
      tpu.vector_store %arg9[%c16, %c0_30], %38 {strides = array<i32>} : memref<128x256xbf16, #tpu.memory_space<vmem>>, vector<112x256xbf16>,
      %cst_31 = arith.constant 0xFF800000 : f32
      %40 = vector.broadcast %cst_31 : f32 to vector<256x1xf32>
      %c0_32 = arith.constant 0 : index
      %c0_33 = arith.constant 0 : index
      %41 = vector.load %arg10[%c0_32, %c0_33] : memref<256x1xf32, #tpu.memory_space<vmem>>, vector<256x1xf32>
      tpu.vector_store %arg10[%c0_32, %c0_33], %40 {strides = array<i32>} : memref<256x1xf32, #tpu.memory_space<vmem>>, vector<256x1xf32>,
      %cst_34 = arith.constant 0.000000e+00 : f32
      %42 = vector.broadcast %cst_34 : f32 to vector<256x1xf32>
      %c0_35 = arith.constant 0 : index
      %c0_36 = arith.constant 0 : index
      %43 = vector.load %arg11[%c0_35, %c0_36] : memref<256x1xf32, #tpu.memory_space<vmem>>, vector<256x1xf32>
      tpu.vector_store %arg11[%c0_35, %c0_36], %42 {strides = array<i32>} : memref<256x1xf32, #tpu.memory_space<vmem>>, vector<256x1xf32>,
      %cst_37 = arith.constant 0.000000e+00 : f32
      %44 = vector.broadcast %cst_37 : f32 to vector<256x128xf32>
      %c0_38 = arith.constant 0 : index
      %c0_39 = arith.constant 0 : index
      %45 = vector.load %arg12[%c0_38, %c0_39] : memref<256x128xf32, #tpu.memory_space<vmem>>, vector<256x128xf32>
      tpu.vector_store %arg12[%c0_38, %c0_39], %44 {strides = array<i32>} : memref<256x128xf32, #tpu.memory_space<vmem>>, vector<256x128xf32>,
    } else {
    }
    %c0 = arith.constant 0 : index
    %c0_1 = arith.constant 0 : index
    %c0_2 = arith.constant 0 : index
    %3 = vector.load %arg4[%c0, %c0_1, %c0_2] : memref<1x16x256xbf16, #tpu.memory_space<vmem>>, vector<1x16x256xbf16>
    %4 = vector.shape_cast %3 : vector<1x16x256xbf16> to vector<16x256xbf16>
    %c0_3 = arith.constant 0 : index
    %c0_4 = arith.constant 0 : index
    %5 = vector.load %arg9[%c0_3, %c0_4] : memref<128x256xbf16, #tpu.memory_space<vmem>>, vector<16x256xbf16>
    tpu.vector_store %arg9[%c0_3, %c0_4], %4 {strides = array<i32>} : memref<128x256xbf16, #tpu.memory_space<vmem>>, vector<16x256xbf16>,
    %c0_5 = arith.constant 0 : index
    %c0_6 = arith.constant 0 : index
    %c0_7 = arith.constant 0 : index
    %6 = vector.load %arg3[%c0_5, %c0_6, %c0_7] : memref<1x256x128xbf16, #tpu.memory_space<vmem>>, vector<1x256x128xbf16>
    %7 = vector.shape_cast %6 : vector<1x256x128xbf16> to vector<256x128xbf16>
    %c0_8 = arith.constant 0 : index
    %c0_9 = arith.constant 0 : index
    %8 = vector.load %arg9[%c0_8, %c0_9] : memref<128x256xbf16, #tpu.memory_space<vmem>>, vector<128x256xbf16>
    %cst = arith.constant dense<0.000000e+00> : vector<256x256xf32>
    %9 = tpu.matmul %7, %8, %cst {dimension_numbers = #tpu.dot_dimension_numbers<[1], [0], [0], [1], [0, 0, 1, 1], [], []>} : vector<256x128xbf16>, vector<128x256xbf16>, vector<256x256xf32> -> vector<256x256xf32>
    %c0_10 = arith.constant 0 : index
    %c0_11 = arith.constant 0 : index
    %10 = vector.load %arg10[%c0_10, %c0_11] : memref<256x1xf32, #tpu.memory_space<vmem>>, vector<256x1xf32>
    %cst_12 = arith.constant dense<0xFF800000> : vector<256xf32>
    %11 = vector.multi_reduction <maximumf>, %9, %cst_12 [1] : vector<256x256xf32> to vector<256xf32>
    %12 = vector.shape_cast %11 : vector<256xf32> to vector<256x1xf32>
    %13 = arith.maximumf %10, %12 : vector<256x1xf32>
    %14 = arith.subf %10, %13 : vector<256x1xf32>
    %15 = math.exp %14 : vector<256x1xf32>
    %16 = vector.broadcast %13 : vector<256x1xf32> to vector<256x256xf32>
    %17 = arith.subf %9, %16 : vector<256x256xf32>
    %18 = math.exp %17 : vector<256x256xf32>
    %c0_13 = arith.constant 0 : index
    %c0_14 = arith.constant 0 : index
    %19 = vector.load %arg11[%c0_13, %c0_14] : memref<256x1xf32, #tpu.memory_space<vmem>>, vector<256x1xf32>
    %20 = arith.mulf %15, %19 : vector<256x1xf32>
    %cst_15 = arith.constant dense<0.000000e+00> : vector<256xf32>
    %21 = vector.multi_reduction <add>, %18, %cst_15 [1] : vector<256x256xf32> to vector<256xf32>
    %22 = vector.shape_cast %21 : vector<256xf32> to vector<256x1xf32>
    %23 = arith.addf %20, %22 : vector<256x1xf32>
    %c0_16 = arith.constant 0 : index
    %c0_17 = arith.constant 0 : index
    %24 = vector.load %arg11[%c0_16, %c0_17] : memref<256x1xf32, #tpu.memory_space<vmem>>, vector<256x1xf32>
    tpu.vector_store %arg11[%c0_16, %c0_17], %23 {strides = array<i32>} : memref<256x1xf32, #tpu.memory_space<vmem>>, vector<256x1xf32>,
    %25 = arith.truncf %18 : vector<256x256xf32> to vector<256x256xbf16>
    %c0_18 = arith.constant 0 : index
    %c0_19 = arith.constant 0 : index
    %c0_20 = arith.constant 0 : index
    %26 = vector.load %arg5[%c0_18, %c0_19, %c0_20] : memref<1x128x256xbf16, #tpu.memory_space<vmem>>, vector<1x128x256xbf16>
    %27 = vector.shape_cast %26 : vector<1x128x256xbf16> to vector<128x256xbf16>
    %cst_21 = arith.constant dense<0.000000e+00> : vector<256x128xf32>
    %28 = tpu.matmul %25, %27, %cst_21 {dimension_numbers = #tpu.dot_dimension_numbers<[1], [1], [0], [0], [0, 0, 1, 0], [], []>} : vector<256x256xbf16>, vector<128x256xbf16>, vector<256x128xf32> -> vector<256x128xf32>
    %c0_22 = arith.constant 0 : index
    %c0_23 = arith.constant 0 : index
    %29 = vector.load %arg12[%c0_22, %c0_23] : memref<256x128xf32, #tpu.memory_space<vmem>>, vector<256x128xf32>
    %30 = vector.broadcast %15 : vector<256x1xf32> to vector<256x128xf32>
    %31 = arith.mulf %30, %29 : vector<256x128xf32>
    %32 = arith.addf %31, %28 : vector<256x128xf32>
    %c0_24 = arith.constant 0 : index
    %c0_25 = arith.constant 0 : index
    %33 = vector.load %arg12[%c0_24, %c0_25] : memref<256x128xf32, #tpu.memory_space<vmem>>, vector<256x128xf32>
    tpu.vector_store %arg12[%c0_24, %c0_25], %32 {strides = array<i32>} : memref<256x128xf32, #tpu.memory_space<vmem>>, vector<256x128xf32>,
    %c0_26 = arith.constant 0 : index
    %c0_27 = arith.constant 0 : index
    %34 = vector.load %arg10[%c0_26, %c0_27] : memref<256x1xf32, #tpu.memory_space<vmem>>, vector<256x1xf32>
    tpu.vector_store %arg10[%c0_26, %c0_27], %13 {strides = array<i32>} : memref<256x1xf32, #tpu.memory_space<vmem>>, vector<256x1xf32>,
    %c1_i32 = arith.constant 1 : i32
    %35 = arith.cmpi eq, %arg2, %c1_i32 : i32
    %36 = arith.extui %35 : i1 to i32
    %c0_i32_28 = arith.constant 0 : i32
    %37 = arith.cmpi ne, %36, %c0_i32_28 : i32
    scf.if %37 {
      %c0_29 = arith.constant 0 : index
      %c0_30 = arith.constant 0 : index
      %38 = vector.load %arg11[%c0_29, %c0_30] : memref<256x1xf32, #tpu.memory_space<vmem>>, vector<256x1xf32>
      %cst_31 = arith.constant 1.000000e+00 : f32
      %39 = vector.broadcast %cst_31 : f32 to vector<256x1xf32>
      %40 = arith.divf %39, %38 : vector<256x1xf32>
      %c0_32 = arith.constant 0 : index
      %c0_33 = arith.constant 0 : index
      %41 = vector.load %arg12[%c0_32, %c0_33] : memref<256x128xf32, #tpu.memory_space<vmem>>, vector<256x128xf32>
      %42 = vector.broadcast %40 : vector<256x1xf32> to vector<256x128xf32>
      %43 = arith.mulf %41, %42 : vector<256x128xf32>
      %c0_34 = arith.constant 0 : index
      %c0_35 = arith.constant 0 : index
      %44 = memref.load %arg7[%c0_34, %c0_35] : memref<1x1xf32, #tpu.memory_space<smem>>
      %45 = tpu.transpose %43, [1, 0] : vector<256x128xf32> -> vector<128x256xf32>
      %46 = vector.broadcast %44 : f32 to vector<128x256xf32>
      %47 = arith.mulf %46, %45 : vector<128x256xf32>
      %c0_36 = arith.constant 0 : index
      %c0_37 = arith.constant 0 : index
      %c0_38 = arith.constant 0 : index
      %48 = vector.load %arg6[%c0_36, %c0_37, %c0_38] : memref<1x128x256xf32, #tpu.memory_space<vmem>>, vector<1x128x256xf32>
      %49 = vector.shape_cast %48 : vector<1x128x256xf32> to vector<128x256xf32>
      %50 = arith.addf %47, %49 : vector<128x256xf32>
      %c0_39 = arith.constant 0 : index
      %c0_40 = arith.constant 0 : index
      %c0_41 = arith.constant 0 : index
      %51 = vector.load %arg8[%c0_39, %c0_40, %c0_41] : memref<1x128x256xf32, #tpu.memory_space<vmem>>, vector<1x128x256xf32>
      %52 = vector.shape_cast %51 : vector<1x128x256xf32> to vector<128x256xf32>
      %53 = vector.shape_cast %50 : vector<128x256xf32> to vector<1x128x256xf32>
      tpu.vector_store %arg8[%c0_39, %c0_40, %c0_41], %53 {strides = array<i32>} : memref<1x128x256xf32, #tpu.memory_space<vmem>>, vector<1x128x256xf32>,
    } else {
    }
    return
  }
  func.func @transform_0(%arg0: i32, %arg1: i32, %arg2: i32) -> (i32, i32, i32) {
    %c0_i32 = arith.constant 0 : i32
    %c0_i32_0 = arith.constant 0 : i32
    return %arg0, %arg1, %c0_i32 : i32, i32, i32
  }
  func.func @transform_1(%arg0: i32, %arg1: i32, %arg2: i32) -> (i32, i32, i32) {
    %c0_i32 = arith.constant 0 : i32
    %c0_i32_0 = arith.constant 0 : i32
    return %arg0, %c0_i32, %arg2 : i32, i32, i32
  }
  func.func @transform_2(%arg0: i32, %arg1: i32, %arg2: i32) -> (i32, i32, i32) {
    %c0_i32 = arith.constant 0 : i32
    %c0_i32_0 = arith.constant 0 : i32
    return %arg0, %c0_i32, %arg2 : i32, i32, i32
  }
  func.func @transform_3(%arg0: i32, %arg1: i32, %arg2: i32) -> (i32, i32, i32) {
    %c0_i32 = arith.constant 0 : i32
    %c0_i32_0 = arith.constant 0 : i32
    return %arg0, %c0_i32, %arg1 : i32, i32, i32
  }
  func.func @transform_4(%arg0: i32, %arg1: i32, %arg2: i32) -> (i32, i32) {
    %c0_i32 = arith.constant 0 : i32
    %c0_i32_0 = arith.constant 0 : i32
    %c0_i32_1 = arith.constant 0 : i32
    return %c0_i32, %c0_i32_0 : i32, i32
  }
  func.func @transform_5(%arg0: i32, %arg1: i32, %arg2: i32) -> (i32, i32, i32) {
    %c0_i32 = arith.constant 0 : i32
    %c0_i32_0 = arith.constant 0 : i32
    return %arg0, %c0_i32, %arg1 : i32, i32, i32
  }
}

</mosaic_0001>

<llo_original>
// kernel: tpu_custom_call.1
$region0: #{tpu_custom_call.1}
  #allocation0 [shape = 'u32[]', space=smem, size = 0x4, offset = 0x4, fixed_abs, tag = 'smem constant byte address 0x4 - core index']
  #allocation1 [shape = 'u32[144,128]{1,0:T(1,128)}', space=vmem, size = 0x12000, scoped, tag = 'internal scratch']
  #allocation2 [shape = 'bf16[128,256]{1,0:T(16,128)(2,1)}', space=vmem, size = 0x10000, scoped, tag = 'scratch operand']
  #allocation3 [shape = 'f32[256,1]{1,0:T(8,128)}', space=vmem, size = 0x20000, scoped, tag = 'scratch operand']
  #allocation4 [shape = 'f32[256,1]{1,0:T(8,128)}', space=vmem, size = 0x20000, scoped, tag = 'scratch operand']
  #allocation5 [shape = 'f32[256,128]{1,0:T(8,128)}', space=vmem, size = 0x20000, scoped, tag = 'scratch operand']
  #allocation6 [shape = 'f32[1,1]{1,0:T(1,128)S(6)}', space=smem, size = 0x200, scoped, tag = 'scoped memory for tpu_custom_call.1']
  %s0 = inlined_call_operand.hbm [shape: bf16[2,512,128], index: 0, kind: input, shape index: {}]
  %s1 = inlined_call_operand.hbm [shape: bf16[2,16,512], index: 1, kind: input, shape index: {}]
  %s2 = inlined_call_operand.hbm [shape: bf16[2,128,512], index: 2, kind: input, shape index: {}]
  %s3 = inlined_call_operand.hbm [shape: f32[2,128,512], index: 3, kind: input, shape index: {}]
  %s4 = inlined_call_operand.<no memory space> [shape: f32[1,1], index: 4, kind: input, shape index: {}]
  %s5 = inlined_call_operand.hbm [shape: f32[2,128,512], index: 5, kind: output, shape index: {}]
  %s6 = sld [smem:[#allocation0]]
  $region77: #{tpu_custom_call.1} parent=0
    _
  %s8 = ssub.s32 1, %s6
  %s9 = scalar_select 0, %s8, %s6
  %10 = sst [smem:[#allocation6]] %s4
  $region1: #{tpu_custom_call.1} parent=0
    #allocation7 [shape = 'u8[131072]{0}', space=vmem, size = 0x20000, scoped, tag = 'input window, operand 0']
    #allocation8 [shape = 's32[2]{0}', space=sflag, size = 0x8, scoped, tag = 'scoped memory for tpu_custom_call.1']
    #allocation9 [shape = 's32[2]{0}', space=sflag, size = 0x8, scoped, tag = 'scoped memory for tpu_custom_call.1']
    #allocation10 [shape = 'u8[16384]{0}', space=vmem, size = 0x4000, scoped, tag = 'input window, operand 1']
    #allocation11 [shape = 's32[2]{0}', space=sflag, size = 0x8, scoped, tag = 'scoped memory for tpu_custom_call.1']
    #allocation12 [shape = 'u8[131072]{0}', space=vmem, size = 0x20000, scoped, tag = 'input window, operand 2']
    #allocation13 [shape = 'u8[262144]{0}', space=vmem, size = 0x40000, scoped, tag = 'input window, operand 3']
    #allocation14 [shape = 's32[2]{0}', space=sflag, size = 0x8, scoped, tag = 'scoped memory for tpu_custom_call.1']
    #allocation15 [shape = 'u8[262144]{0}', space=vmem, size = 0x40000, scoped, tag = 'output window, operand 0']
    %11 = vsyncpa [#allocation8], 0
    %s12 = scalar_lea.sflag [#allocation8], 1
    %13 = vsyncpa %s12, 0
    %14 = vsyncpa [#allocation11], 0
    %s15 = scalar_lea.sflag [#allocation11], 1
    %16 = vsyncpa %s15, 0
    %17 = vsyncpa [#allocation14], 0
    %s18 = scalar_lea.sflag [#allocation14], 1
    %19 = vsyncpa %s18, 0
    %20 = vsyncpa [#allocation9], 0
    %s21 = scalar_lea.sflag [#allocation9], 1
    %22 = vsyncpa %s21, 0
    loop: start=0, step=1, limit=10
    $region2: #{tpu_custom_call.1} parent=1 // loop_pre_header
      _
    $region3: #{tpu_custom_call.1} parent=1 // loop_header
      %s24 = sphi 0, %s28
      %p25 = scmp.ge.s32.totalorder %s24, 10
      %s31 = sphi 0, %s50
      %s32 = sphi 0, %s46
      %s33 = sphi 0, %s42
      %s34 = sphi 0, %s31
      %s35 = sphi 0, %s32
      %s36 = sphi 0, %s33
      %s37 = sphi 0, %s34
      %s38 = sphi 0, %s35
      %s39 = sphi 0, %s36
      %s55 = sphi 0, %s57
      %s58 = sphi 0, %s55
      %s59 = sphi 0, %s58
      %s75 = sphi 0, %s59
      %s83 = sphi 0, %s85
      %s86 = sphi 0, %s83
      %s87 = sphi 0, %s86
      %s103 = sphi 0, %s87
      %s111 = sphi 0, %s113
      %s114 = sphi 0, %s111
      %s115 = sphi 0, %s114
      %s131 = sphi 0, %s115
      %s139 = sphi 0, %s141
      %s142 = sphi 0, %s139
      %s143 = sphi 0, %s142
      %s159 = sphi 0, %s143
      %s163 = sphi 0, %s163
      %s165 = sphi 0, %s163
      %s166 = sphi 0, %s165
      %s180 = sphi 0, %s166
      %s188 = sphi 0, %s190
      %s191 = sphi 0, %s188
      %s192 = sphi 0, %s191
      %s208 = sphi 0, %s192
    $region4: #{tpu_custom_call.1} parent=1 // loop_header_branch
      %27 = sbr.rel (%p25) target = $region8
    $region5: #{tpu_custom_call.1} parent=1 // loop_body
      %s29 = ssub.s32 %s24, 1
      %s30 = ssub.s32 %s24, 2
      %s40 = sadd.s32 1, %s33
      %p41 = scmp.ge.s32.totalorder %s40, 2
      %s42 = scalar_select %p41, 0, %s40
      %s43 = sadd.s32 1, %s32
      %s44 = scalar_select %p41, %s43, %s32
      %p45 = scmp.ge.s32.totalorder %s44, 2
      %s46 = scalar_select %p45, 0, %s44
      %s47 = sadd.s32 1, %s31
      %s48 = scalar_select %p45, %s47, %s31
      %p49 = scmp.ge.s32.totalorder %s48, 2
      %s50 = scalar_select %p49, 0, %s48
      %s51 = ssub.s32 %s31, %s50
      %s52 = ssub.s32 %s32, %s46
      %s53 = sor.u32 %s51, %s52
      %p54 = scmp.eq.s32.totalorder %s53, 0
      %s56 = sadd.s32 %s55, 1
      %s57 = scalar_select %p54, %s55, %s56
      %p60 = pneg %p54
      %p61 = scmp.eq.s32.totalorder %s24, 7
      %p62 = por %p60, %p61
      %p63 = scmp.ne.s32.totalorder %s55, %s58
      %p64 = scmp.eq.s32.totalorder %s24, 0
      %p65 = por %p63, %p64
      %p66 = scmp.ne.s32.totalorder %s55, %s58
      %p67 = scmp.eq.s32.totalorder %s29, 7
      %p68 = por %p66, %p67
      %p69 = scmp.ne.s32.totalorder %s58, %s59
      %p70 = scmp.eq.s32.totalorder %s29, 0
      %p71 = por %p69, %p70
      %p72 = scmp.ne.s32.totalorder %s58, %s59
      %p73 = scmp.eq.s32.totalorder %s30, 7
      %p74 = por %p72, %p73
      %p76 = scmp.ne.s32.totalorder %s59, %s75
      %p77 = scmp.eq.s32.totalorder %s30, 0
      %p78 = por %p76, %p77
      %s79 = ssub.s32 %s31, %s50
      %s80 = ssub.s32 %s33, %s42
      %s81 = sor.u32 %s79, %s80
      %p82 = scmp.eq.s32.totalorder %s81, 0
      %s84 = sadd.s32 %s83, 1
      %s85 = scalar_select %p82, %s83, %s84
      %p88 = pneg %p82
      %p89 = scmp.eq.s32.totalorder %s24, 7
      %p90 = por %p88, %p89
      %p91 = scmp.ne.s32.totalorder %s83, %s86
      %p92 = scmp.eq.s32.totalorder %s24, 0
      %p93 = por %p91, %p92
      %p94 = scmp.ne.s32.totalorder %s83, %s86
      %p95 = scmp.eq.s32.totalorder %s29, 7
      %p96 = por %p94, %p95
      %p97 = scmp.ne.s32.totalorder %s86, %s87
      %p98 = scmp.eq.s32.totalorder %s29, 0
      %p99 = por %p97, %p98
      %p100 = scmp.ne.s32.totalorder %s86, %s87
      %p101 = scmp.eq.s32.totalorder %s30, 7
      %p102 = por %p100, %p101
      %p104 = scmp.ne.s32.totalorder %s87, %s103
      %p105 = scmp.eq.s32.totalorder %s30, 0
      %p106 = por %p104, %p105
      %s107 = ssub.s32 %s31, %s50
      %s108 = ssub.s32 %s33, %s42
      %s109 = sor.u32 %s107, %s108
      %p110 = scmp.eq.s32.totalorder %s109, 0
      %s112 = sadd.s32 %s111, 1
      %s113 = scalar_select %p110, %s111, %s112
      %p116 = pneg %p110
      %p117 = scmp.eq.s32.totalorder %s24, 7
      %p118 = por %p116, %p117
      %p119 = scmp.ne.s32.totalorder %s111, %s114
      %p120 = scmp.eq.s32.totalorder %s24, 0
      %p121 = por %p119, %p120
      %p122 = scmp.ne.s32.totalorder %s111, %s114
      %p123 = scmp.eq.s32.totalorder %s29, 7
      %p124 = por %p122, %p123
      %p125 = scmp.ne.s32.totalorder %s114, %s115
      %p126 = scmp.eq.s32.totalorder %s29, 0
      %p127 = por %p125, %p126
      %p128 = scmp.ne.s32.totalorder %s114, %s115
      %p129 = scmp.eq.s32.totalorder %s30, 7
      %p130 = por %p128, %p129
      %p132 = scmp.ne.s32.totalorder %s115, %s131
      %p133 = scmp.eq.s32.totalorder %s30, 0
      %p134 = por %p132, %p133
      %s135 = ssub.s32 %s31, %s50
      %s136 = ssub.s32 %s32, %s46
      %s137 = sor.u32 %s135, %s136
      %p138 = scmp.eq.s32.totalorder %s137, 0
      %s140 = sadd.s32 %s139, 1
      %s141 = scalar_select %p138, %s139, %s140
      %p144 = pneg %p138
      %p145 = scmp.eq.s32.totalorder %s24, 7
      %p146 = por %p144, %p145
      %p147 = scmp.ne.s32.totalorder %s139, %s142
      %p148 = scmp.eq.s32.totalorder %s24, 0
      %p149 = por %p147, %p148
      %p150 = scmp.ne.s32.totalorder %s139, %s142
      %p151 = scmp.eq.s32.totalorder %s29, 7
      %p152 = por %p150, %p151
      %p153 = scmp.ne.s32.totalorder %s142, %s143
      %p154 = scmp.eq.s32.totalorder %s29, 0
      %p155 = por %p153, %p154
      %p156 = scmp.ne.s32.totalorder %s142, %s143
      %p157 = scmp.eq.s32.totalorder %s30, 7
      %p158 = por %p156, %p157
      %p160 = scmp.ne.s32.totalorder %s143, %s159
      %p161 = scmp.eq.s32.totalorder %s30, 0
      %p162 = por %p160, %p161
      %s164 = sadd.s32 %s163, 1
      %p167 = scmp.eq.s32.totalorder %s24, 7
      %p168 = scmp.ne.s32.totalorder %s163, %s165
      %p169 = scmp.eq.s32.totalorder %s24, 0
      %p170 = por %p168, %p169
      %p171 = scmp.ne.s32.totalorder %s163, %s165
      %p172 = scmp.eq.s32.totalorder %s29, 7
      %p173 = por %p171, %p172
      %p174 = scmp.ne.s32.totalorder %s165, %s166
      %p175 = scmp.eq.s32.totalorder %s29, 0
      %p176 = por %p174, %p175
      %p177 = scmp.ne.s32.totalorder %s165, %s166
      %p178 = scmp.eq.s32.totalorder %s30, 7
      %p179 = por %p177, %p178
      %p181 = scmp.ne.s32.totalorder %s166, %s180
      %p182 = scmp.eq.s32.totalorder %s30, 0
      %p183 = por %p181, %p182
      %s184 = ssub.s32 %s31, %s50
      %s185 = ssub.s32 %s32, %s46
      %s186 = sor.u32 %s184, %s185
      %p187 = scmp.eq.s32.totalorder %s186, 0
      %s189 = sadd.s32 %s188, 1
      %s190 = scalar_select %p187, %s188, %s189
      %p193 = pneg %p187
      %p194 = scmp.eq.s32.totalorder %s24, 7
      %p195 = por %p193, %p194
      %p196 = scmp.ne.s32.totalorder %s188, %s191
      %p197 = scmp.eq.s32.totalorder %s24, 0
      %p198 = por %p196, %p197
      %p199 = scmp.ne.s32.totalorder %s188, %s191
      %p200 = scmp.eq.s32.totalorder %s29, 7
      %p201 = por %p199, %p200
      %p202 = scmp.ne.s32.totalorder %s191, %s192
      %p203 = scmp.eq.s32.totalorder %s29, 0
      %p204 = por %p202, %p203
      %p205 = scmp.ne.s32.totalorder %s191, %s192
      %p206 = scmp.eq.s32.totalorder %s30, 7
      %p207 = por %p205, %p206
      %p209 = scmp.ne.s32.totalorder %s192, %s208
      %p210 = scmp.eq.s32.totalorder %s30, 0
      %p211 = por %p209, %p210
      %p212 = scmp.le.s32.totalorder 1, %s24
      %p213 = scmp.lt.s32.totalorder %s24, 9
      %p214 = pnand %p212, %p213
      %p215 = pneg %p214
      // Predicated region
      $region9: #{tpu_custom_call.1} parent=5 // pred_check
        _
      $region10: #{tpu_custom_call.1} parent=5 // pred_check_branch
        %217 = sbr.rel (%p214) target = $region12
      $region11: #{tpu_custom_call.1} parent=5 // pred_region
        %s218 = ssub.s32 %s24, 1
        // Predicated region
        $region13: #{tpu_custom_call.1} parent=11 // pred_check
          %p219 = pneg %p176
        $region14: #{tpu_custom_call.1} parent=11 // pred_check_branch
          %221 = sbr.rel (%p219) target = $region16
        $region15: #{tpu_custom_call.1} parent=11 // pred_region
          _
        $region16: #{tpu_custom_call.1} parent=11 // pred_fallthru
          _
      $region12: #{tpu_custom_call.1} parent=5 // pred_fallthru
        _
      %p222 = scmp.lt.s32.totalorder %s24, 8
      // Predicated region
      $region17: #{tpu_custom_call.1} parent=5 // pred_check
        %p223 = pneg %p222
      $region18: #{tpu_custom_call.1} parent=5 // pred_check_branch
        %225 = sbr.rel (%p223) target = $region20
      $region19: #{tpu_custom_call.1} parent=5 // pred_region
        // Predicated region
        $region21: #{tpu_custom_call.1} parent=19 // pred_check
          %p226 = pneg %p65
        $region22: #{tpu_custom_call.1} parent=19 // pred_check_branch
          %228 = sbr.rel (%p226) target = $region24
        $region23: #{tpu_custom_call.1} parent=19 // pred_region
          %s229 = sand.u32 %s55, 1
          %s230 = scalar_lea.sflag [#allocation8], %s229
          %s231 = sand.u32 %s55, 1
          %s232 = smul.addr %s231, 128
          %s233 = scalar_lea.vmem [#allocation7], %s232
          %s234 = smul.u32 32, %s32
          %s236 = ssub.s32 2048, 2048
          %237 = vsyncadd %s230, %s236
          %s238 = smul.addr %s31, 64
          %s239 = sadd.s32 %s234, %s238
          %s240 = smul.addr %s239, 64
          %s241 = scalar_lea.hbm %s0, %s240
          %s242 = sshll.u32 %s233, 4
          %s243 = int_to_ptr.vmem [resolvable:$true] %s242
          %248 = dma.hbm_to_vmem [thread:$0]  %s241, 2048, %s243, %s230, 64, 64, 4
        $region24: #{tpu_custom_call.1} parent=19 // pred_fallthru
          _
        // Predicated region
        $region25: #{tpu_custom_call.1} parent=19 // pred_check
          %p249 = pneg %p93
        $region26: #{tpu_custom_call.1} parent=19 // pred_check_branch
          %251 = sbr.rel (%p249) target = $region28
        $region27: #{tpu_custom_call.1} parent=19 // pred_region
          %s252 = sand.u32 %s24, 1
          %s253 = scalar_lea.sflag [#allocation11], %s252
          %s254 = sand.u32 %s83, 1
          %s255 = smul.addr %s254, 16
          %s256 = scalar_lea.vmem [#allocation10], %s255
          %s257 = smul.u32 2, %s33
          %s259 = ssub.s32 256, 256
          %260 = vsyncadd %s253, %s259
          %s261 = smul.addr %s31, 8
          %s262 = sadd.s32 %s257, %s261
          %s263 = smul.addr %s262, 64
          %s264 = scalar_lea.hbm %s1, %s263
          %s265 = sshll.u32 %s256, 4
          %s266 = int_to_ptr.vmem [resolvable:$true] %s265
          %271 = dma.hbm_to_vmem [thread:$0]  %s264, 256, %s266, %s253, 256, 128, 8
        $region28: #{tpu_custom_call.1} parent=19 // pred_fallthru
          _
        // Predicated region
        $region29: #{tpu_custom_call.1} parent=19 // pred_check
          %p272 = pneg %p121
        $region30: #{tpu_custom_call.1} parent=19 // pred_check_branch
          %274 = sbr.rel (%p272) target = $region32
        $region31: #{tpu_custom_call.1} parent=19 // pred_region
          %s275 = sand.u32 %s24, 1
          %s276 = scalar_lea.sflag [#allocation11], %s275
          %s277 = sand.u32 %s111, 1
          %s278 = smul.addr %s277, 128
          %s279 = scalar_lea.vmem [#allocation12], %s278
          %s280 = smul.u32 2, %s33
          %s282 = ssub.s32 2048, 2048
          %283 = vsyncadd %s276, %s282
          %s284 = smul.addr %s31, 64
          %s285 = sadd.s32 %s280, %s284
          %s286 = smul.addr %s285, 64
          %s287 = scalar_lea.hbm %s2, %s286
          %s288 = sshll.u32 %s279, 4
          %s289 = int_to_ptr.vmem [resolvable:$true] %s288
          %294 = dma.hbm_to_vmem [thread:$0]  %s287, 2048, %s289, %s276, 256, 128, 8
        $region32: #{tpu_custom_call.1} parent=19 // pred_fallthru
          _
        // Predicated region
        $region33: #{tpu_custom_call.1} parent=19 // pred_check
          %p295 = pneg %p149
        $region34: #{tpu_custom_call.1} parent=19 // pred_check_branch
          %297 = sbr.rel (%p295) target = $region36
        $region35: #{tpu_custom_call.1} parent=19 // pred_region
          %s298 = sand.u32 %s139, 1
          %s299 = scalar_lea.sflag [#allocation14], %s298
          %s300 = sand.u32 %s139, 1
          %s301 = smul.addr %s300, 256
          %s302 = scalar_lea.vmem [#allocation13], %s301
          %s303 = smul.u32 2, %s32
          %s305 = ssub.s32 4096, 4096
          %306 = vsyncadd %s299, %s305
          %s307 = smul.addr %s31, 64
          %s308 = sadd.s32 %s303, %s307
          %s309 = smul.addr %s308, 128
          %s310 = scalar_lea.hbm %s3, %s309
          %s311 = sshll.u32 %s302, 4
          %s312 = int_to_ptr.vmem [resolvable:$true] %s311
          %317 = dma.hbm_to_vmem [thread:$0]  %s310, 4096, %s312, %s299, 512, 256, 16
        $region36: #{tpu_custom_call.1} parent=19 // pred_fallthru
          _
      $region20: #{tpu_custom_call.1} parent=5 // pred_fallthru
        _
      %p318 = scmp.le.s32.totalorder 1, %s24
      %p319 = scmp.lt.s32.totalorder %s24, 9
      %p320 = pnand %p318, %p319
      %p321 = pneg %p320
      // Predicated region
      $region37: #{tpu_custom_call.1} parent=5 // pred_check
        _
      $region38: #{tpu_custom_call.1} parent=5 // pred_check_branch
        %323 = sbr.rel (%p320) target = $region40
      $region39: #{tpu_custom_call.1} parent=5 // pred_region
        %s324 = ssub.s32 %s24, 1
        %s325 = sand.u32 %s58, 1
        %s326 = scalar_lea.sflag [#allocation8], %s325
        %s327 = sand.u32 %s58, 1
        %s328 = smul.addr %s327, 128
        %s329 = scalar_lea.vmem [#allocation7], %s328
        // Predicated region
        $region41: #{tpu_custom_call.1} parent=39 // pred_check
          %p330 = pneg %p71
        $region42: #{tpu_custom_call.1} parent=39 // pred_check_branch
          %332 = sbr.rel (%p330) target = $region44
        $region43: #{tpu_custom_call.1} parent=39 // pred_region
          %333 = dma.done %s326, 2048
        $region44: #{tpu_custom_call.1} parent=39 // pred_fallthru
          _
        %s334 = sand.u32 %s29, 1
        %s335 = scalar_lea.sflag [#allocation11], %s334
        %s336 = sand.u32 %s86, 1
        %s337 = smul.addr %s336, 16
        %s338 = scalar_lea.vmem [#allocation10], %s337
        // Predicated region
        $region45: #{tpu_custom_call.1} parent=39 // pred_check
          %p339 = pneg %p99
        $region46: #{tpu_custom_call.1} parent=39 // pred_check_branch
          %341 = sbr.rel (%p339) target = $region48
        $region47: #{tpu_custom_call.1} parent=39 // pred_region
          %342 = dma.done %s335, 256
        $region48: #{tpu_custom_call.1} parent=39 // pred_fallthru
          _
        %s343 = sand.u32 %s29, 1
        %s344 = scalar_lea.sflag [#allocation11], %s343
        %s345 = sand.u32 %s114, 1
        %s346 = smul.addr %s345, 128
        %s347 = scalar_lea.vmem [#allocation12], %s346
        // Predicated region
        $region49: #{tpu_custom_call.1} parent=39 // pred_check
          %p348 = pneg %p127
        $region50: #{tpu_custom_call.1} parent=39 // pred_check_branch
          %350 = sbr.rel (%p348) target = $region52
        $region51: #{tpu_custom_call.1} parent=39 // pred_region
          %351 = dma.done %s344, 2048
        $region52: #{tpu_custom_call.1} parent=39 // pred_fallthru
          _
        %s352 = sand.u32 %s142, 1
        %s353 = scalar_lea.sflag [#allocation14], %s352
        %s354 = sand.u32 %s142, 1
        %s355 = smul.addr %s354, 256
        %s356 = scalar_lea.vmem [#allocation13], %s355
        // Predicated region
        $region53: #{tpu_custom_call.1} parent=39 // pred_check
          %p357 = pneg %p155
        $region54: #{tpu_custom_call.1} parent=39 // pred_check_branch
          %359 = sbr.rel (%p357) target = $region56
        $region55: #{tpu_custom_call.1} parent=39 // pred_region
          %360 = dma.done %s353, 4096
        $region56: #{tpu_custom_call.1} parent=39 // pred_fallthru
          _
        %s361 = sand.u32 %s58, 1
        %s362 = scalar_lea.sflag [#allocation8], %s361
        %s363 = sand.u32 %s58, 1
        %s364 = smul.addr %s363, 128
        %s365 = scalar_lea.vmem [#allocation7], %s364
        %p366 = pneg %p71
        %p367 = pneg %p68
        %s368 = sand.u32 %s29, 1
        %s369 = scalar_lea.sflag [#allocation11], %s368
        %s370 = sand.u32 %s86, 1
        %s371 = smul.addr %s370, 16
        %s372 = scalar_lea.vmem [#allocation10], %s371
        %p373 = pneg %p99
        %p374 = pneg %p96
        %s375 = sand.u32 %s29, 1
        %s376 = scalar_lea.sflag [#allocation11], %s375
        %s377 = sand.u32 %s114, 1
        %s378 = smul.addr %s377, 128
        %s379 = scalar_lea.vmem [#allocation12], %s378
        %p380 = pneg %p127
        %p381 = pneg %p124
        %s382 = sand.u32 %s142, 1
        %s383 = scalar_lea.sflag [#allocation14], %s382
        %s384 = sand.u32 %s142, 1
        %s385 = smul.addr %s384, 256
        %s386 = scalar_lea.vmem [#allocation13], %s385
        %p387 = pneg %p155
        %p388 = pneg %p152
        %p389 = pneg %p176
        %p390 = pneg %p173
        %p391 = pneg %p204
        %p392 = pneg %p201
        %s393 = sand.u32 %s191, 1
        %s394 = scalar_lea.sflag [#allocation9], %s393
        %s395 = sand.u32 %s191, 1
        %s396 = smul.addr %s395, 256
        %s397 = scalar_lea.vmem [#allocation15], %s396
        %s398 = smul.u32 32, %s35
        %s399 = smul.u32 2, %s36
        %s400 = smul.u32 2, %s36
        %s401 = smul.u32 2, %s35
        %s402 = smul.u32 2, %s35
        %p404 = scmp.eq.s32.totalorder %s36, 0
        // Predicated region
        $region57: #{tpu_custom_call.1} parent=39 // pred_check
          %p405 = pneg %p404
        $region58: #{tpu_custom_call.1} parent=39 // pred_check_branch
          %407 = sbr.rel (%p405) target = $region60
        $region59: #{tpu_custom_call.1} parent=39 // pred_region
          %408 = vst [vmem:[#allocation2 + $0x10] sm:$0xff] 0
          %409 = vst [vmem:[#allocation2 + $0x18] sm:$0xff] 0
          %410 = vst [vmem:[#allocation2 + $0x20] sm:$0xff] 0
          %411 = vst [vmem:[#allocation2 + $0x28] sm:$0xff] 0
          %412 = vst [vmem:[#allocation2 + $0x30] sm:$0xff] 0
          %413 = vst [vmem:[#allocation2 + $0x38] sm:$0xff] 0
          %414 = vst [vmem:[#allocation2 + $0x40] sm:$0xff] 0
          %415 = vst [vmem:[#allocation2 + $0x48] sm:$0xff] 0
          %416 = vst [vmem:[#allocation2 + $0x50] sm:$0xff] 0
          %417 = vst [vmem:[#allocation2 + $0x58] sm:$0xff] 0
          %418 = vst [vmem:[#allocation2 + $0x60] sm:$0xff] 0
          %419 = vst [vmem:[#allocation2 + $0x68] sm:$0xff] 0
          %420 = vst [vmem:[#allocation2 + $0x70] sm:$0xff] 0
          %421 = vst [vmem:[#allocation2 + $0x78] sm:$0xff] 0
          %vm422 = vcmask 7168
          %423 = vst.msk [vmem:[#allocation3] sm:$0xff] %vm422, -inf
          %424 = vst.msk [vmem:[#allocation3 + $0x8] sm:$0xff] %vm422, -inf
          %425 = vst.msk [vmem:[#allocation3 + $0x10] sm:$0xff] %vm422, -inf
          %426 = vst.msk [vmem:[#allocation3 + $0x18] sm:$0xff] %vm422, -inf
          %427 = vst.msk [vmem:[#allocation3 + $0x20] sm:$0xff] %vm422, -inf
          %428 = vst.msk [vmem:[#allocation3 + $0x28] sm:$0xff] %vm422, -inf
          %429 = vst.msk [vmem:[#allocation3 + $0x30] sm:$0xff] %vm422, -inf
          %430 = vst.msk [vmem:[#allocation3 + $0x38] sm:$0xff] %vm422, -inf
          %431 = vst.msk [vmem:[#allocation3 + $0x40] sm:$0xff] %vm422, -inf
          %432 = vst.msk [vmem:[#allocation3 + $0x48] sm:$0xff] %vm422, -inf
          %433 = vst.msk [vmem:[#allocation3 + $0x50] sm:$0xff] %vm422, -inf
          %434 = vst.msk [vmem:[#allocation3 + $0x58] sm:$0xff] %vm422, -inf
          %435 = vst.msk [vmem:[#allocation3 + $0x60] sm:$0xff] %vm422, -inf
          %436 = vst.msk [vmem:[#allocation3 + $0x68] sm:$0xff] %vm422, -inf
          %437 = vst.msk [vmem:[#allocation3 + $0x70] sm:$0xff] %vm422, -inf
          %438 = vst.msk [vmem:[#allocation3 + $0x78] sm:$0xff] %vm422, -inf
          %439 = vst.msk [vmem:[#allocation3 + $0x80] sm:$0xff] %vm422, -inf
          %440 = vst.msk [vmem:[#allocation3 + $0x88] sm:$0xff] %vm422, -inf
          %441 = vst.msk [vmem:[#allocation3 + $0x90] sm:$0xff] %vm422, -inf
          %442 = vst.msk [vmem:[#allocation3 + $0x98] sm:$0xff] %vm422, -inf
          %443 = vst.msk [vmem:[#allocation3 + $0xa0] sm:$0xff] %vm422, -inf
          %444 = vst.msk [vmem:[#allocation3 + $0xa8] sm:$0xff] %vm422, -inf
          %445 = vst.msk [vmem:[#allocation3 + $0xb0] sm:$0xff] %vm422, -inf
          %446 = vst.msk [vmem:[#allocation3 + $0xb8] sm:$0xff] %vm422, -inf
          %447 = vst.msk [vmem:[#allocation3 + $0xc0] sm:$0xff] %vm422, -inf
          %448 = vst.msk [vmem:[#allocation3 + $0xc8] sm:$0xff] %vm422, -inf
          %449 = vst.msk [vmem:[#allocation3 + $0xd0] sm:$0xff] %vm422, -inf
          %450 = vst.msk [vmem:[#allocation3 + $0xd8] sm:$0xff] %vm422, -inf
          %451 = vst.msk [vmem:[#allocation3 + $0xe0] sm:$0xff] %vm422, -inf
          %452 = vst.msk [vmem:[#allocation3 + $0xe8] sm:$0xff] %vm422, -inf
          %453 = vst.msk [vmem:[#allocation3 + $0xf0] sm:$0xff] %vm422, -inf
          %454 = vst.msk [vmem:[#allocation3 + $0xf8] sm:$0xff] %vm422, -inf
          %455 = vst.msk [vmem:[#allocation4] sm:$0xff] %vm422, 0.0
          %456 = vst.msk [vmem:[#allocation4 + $0x8] sm:$0xff] %vm422, 0.0
          %457 = vst.msk [vmem:[#allocation4 + $0x10] sm:$0xff] %vm422, 0.0
          %458 = vst.msk [vmem:[#allocation4 + $0x18] sm:$0xff] %vm422, 0.0
          %459 = vst.msk [vmem:[#allocation4 + $0x20] sm:$0xff] %vm422, 0.0
          %460 = vst.msk [vmem:[#allocation4 + $0x28] sm:$0xff] %vm422, 0.0
          %461 = vst.msk [vmem:[#allocation4 + $0x30] sm:$0xff] %vm422, 0.0
          %462 = vst.msk [vmem:[#allocation4 + $0x38] sm:$0xff] %vm422, 0.0
          %463 = vst.msk [vmem:[#allocation4 + $0x40] sm:$0xff] %vm422, 0.0
          %464 = vst.msk [vmem:[#allocation4 + $0x48] sm:$0xff] %vm422, 0.0
          %465 = vst.msk [vmem:[#allocation4 + $0x50] sm:$0xff] %vm422, 0.0
          %466 = vst.msk [vmem:[#allocation4 + $0x58] sm:$0xff] %vm422, 0.0
          %467 = vst.msk [vmem:[#allocation4 + $0x60] sm:$0xff] %vm422, 0.0
          %468 = vst.msk [vmem:[#allocation4 + $0x68] sm:$0xff] %vm422, 0.0
          %469 = vst.msk [vmem:[#allocation4 + $0x70] sm:$0xff] %vm422, 0.0
          %470 = vst.msk [vmem:[#allocation4 + $0x78] sm:$0xff] %vm422, 0.0
          %471 = vst.msk [vmem:[#allocation4 + $0x80] sm:$0xff] %vm422, 0.0
          %472 = vst.msk [vmem:[#allocation4 + $0x88] sm:$0xff] %vm422, 0.0
          %473 = vst.msk [vmem:[#allocation4 + $0x90] sm:$0xff] %vm422, 0.0
          %474 = vst.msk [vmem:[#allocation4 + $0x98] sm:$0xff] %vm422, 0.0
          %475 = vst.msk [vmem:[#allocation4 + $0xa0] sm:$0xff] %vm422, 0.0
          %476 = vst.msk [vmem:[#allocation4 + $0xa8] sm:$0xff] %vm422, 0.0
          %477 = vst.msk [vmem:[#allocation4 + $0xb0] sm:$0xff] %vm422, 0.0
          %478 = vst.msk [vmem:[#allocation4 + $0xb8] sm:$0xff] %vm422, 0.0
          %479 = vst.msk [vmem:[#allocation4 + $0xc0] sm:$0xff] %vm422, 0.0
          %480 = vst.msk [vmem:[#allocation4 + $0xc8] sm:$0xff] %vm422, 0.0
          %481 = vst.msk [vmem:[#allocation4 + $0xd0] sm:$0xff] %vm422, 0.0
          %482 = vst.msk [vmem:[#allocation4 + $0xd8] sm:$0xff] %vm422, 0.0
          %483 = vst.msk [vmem:[#allocation4 + $0xe0] sm:$0xff] %vm422, 0.0
          %484 = vst.msk [vmem:[#allocation4 + $0xe8] sm:$0xff] %vm422, 0.0
          %485 = vst.msk [vmem:[#allocation4 + $0xf0] sm:$0xff] %vm422, 0.0
          %486 = vst.msk [vmem:[#allocation4 + $0xf8] sm:$0xff] %vm422, 0.0
          %487 = vst [vmem:[#allocation5] sm:$0xff] 0.0
          %488 = vst [vmem:[#allocation5 + $0x8] sm:$0xff] 0.0
          %489 = vst [vmem:[#allocation5 + $0x10] sm:$0xff] 0.0
          %490 = vst [vmem:[#allocation5 + $0x18] sm:$0xff] 0.0
          %491 = vst [vmem:[#allocation5 + $0x20] sm:$0xff] 0.0
          %492 = vst [vmem:[#allocation5 + $0x28] sm:$0xff] 0.0
          %493 = vst [vmem:[#allocation5 + $0x30] sm:$0xff] 0.0
          %494 = vst [vmem:[#allocation5 + $0x38] sm:$0xff] 0.0
          %495 = vst [vmem:[#allocation5 + $0x40] sm:$0xff] 0.0
          %496 = vst [vmem:[#allocation5 + $0x48] sm:$0xff] 0.0
          %497 = vst [vmem:[#allocation5 + $0x50] sm:$0xff] 0.0
          %498 = vst [vmem:[#allocation5 + $0x58] sm:$0xff] 0.0
          %499 = vst [vmem:[#allocation5 + $0x60] sm:$0xff] 0.0
          %500 = vst [vmem:[#allocation5 + $0x68] sm:$0xff] 0.0
          %501 = vst [vmem:[#allocation5 + $0x70] sm:$0xff] 0.0
          %502 = vst [vmem:[#allocation5 + $0x78] sm:$0xff] 0.0
          %503 = vst [vmem:[#allocation5 + $0x80] sm:$0xff] 0.0
          %504 = vst [vmem:[#allocation5 + $0x88] sm:$0xff] 0.0
          %505 = vst [vmem:[#allocation5 + $0x90] sm:$0xff] 0.0
          %506 = vst [vmem:[#allocation5 + $0x98] sm:$0xff] 0.0
          %507 = vst [vmem:[#allocation5 + $0xa0] sm:$0xff] 0.0
          %508 = vst [vmem:[#allocation5 + $0xa8] sm:$0xff] 0.0
          %509 = vst [vmem:[#allocation5 + $0xb0] sm:$0xff] 0.0
          %510 = vst [vmem:[#allocation5 + $0xb8] sm:$0xff] 0.0
          %511 = vst [vmem:[#allocation5 + $0xc0] sm:$0xff] 0.0
          %512 = vst [vmem:[#allocation5 + $0xc8] sm:$0xff] 0.0
          %513 = vst [vmem:[#allocation5 + $0xd0] sm:$0xff] 0.0
          %514 = vst [vmem:[#allocation5 + $0xd8] sm:$0xff] 0.0
          %515 = vst [vmem:[#allocation5 + $0xe0] sm:$0xff] 0.0
          %516 = vst [vmem:[#allocation5 + $0xe8] sm:$0xff] 0.0
          %517 = vst [vmem:[#allocation5 + $0xf0] sm:$0xff] 0.0
          %518 = vst [vmem:[#allocation5 + $0xf8] sm:$0xff] 0.0
        $region60: #{tpu_custom_call.1} parent=39 // pred_fallthru
          _
        %v519 = vld [vmem:[%s338] sm:$0xff]
        %v520 = vld [vmem:[%s338 + $0x8] sm:$0xff]
        %v523 = vunpack.c.l.b16 %v519
        %v524 = vunpack.c.h.b16 %v519
        %v525 = vunpack.c.l.b16 %v520
        %v526 = vunpack.c.h.b16 %v520
        %v527 = vpack.c.b16 %v525, %v523
        %v528 = vpack.c.b16 %v526, %v524
        %531 = vst [vmem:[#allocation2] sm:$0xff] %v527
        %532 = vst [vmem:[#allocation2 + $0x8] sm:$0xff] %v528
        %v533 = vld [vmem:[%s329] sm:$0xf]
        %v534 = vld [vmem:[%s329 + $0x4] sm:$0xf]
        %v535 = vld [vmem:[%s329 + $0x8] sm:$0xf]
        %v536 = vld [vmem:[%s329 + $0xc] sm:$0xf]
        %v537 = vld [vmem:[%s329 + $0x10] sm:$0xf]
        %v538 = vld [vmem:[%s329 + $0x14] sm:$0xf]
        %v539 = vld [vmem:[%s329 + $0x18] sm:$0xf]
        %v540 = vld [vmem:[%s329 + $0x1c] sm:$0xf]
        %v541 = vld [vmem:[%s329 + $0x20] sm:$0xf]
        %v542 = vld [vmem:[%s329 + $0x24] sm:$0xf]
        %v543 = vld [vmem:[%s329 + $0x28] sm:$0xf]
        %v544 = vld [vmem:[%s329 + $0x2c] sm:$0xf]
        %v545 = vld [vmem:[%s329 + $0x30] sm:$0xf]
        %v546 = vld [vmem:[%s329 + $0x34] sm:$0xf]
        %v547 = vld [vmem:[%s329 + $0x38] sm:$0xf]
        %v548 = vld [vmem:[%s329 + $0x3c] sm:$0xf]
        %v549 = vld [vmem:[%s329 + $0x40] sm:$0xf]
        %v550 = vld [vmem:[%s329 + $0x44] sm:$0xf]
        %v551 = vld [vmem:[%s329 + $0x48] sm:$0xf]
        %v552 = vld [vmem:[%s329 + $0x4c] sm:$0xf]
        %v553 = vld [vmem:[%s329 + $0x50] sm:$0xf]
        %v554 = vld [vmem:[%s329 + $0x54] sm:$0xf]
        %v555 = vld [vmem:[%s329 + $0x58] sm:$0xf]
        %v556 = vld [vmem:[%s329 + $0x5c] sm:$0xf]
        %v557 = vld [vmem:[%s329 + $0x60] sm:$0xf]
        %v558 = vld [vmem:[%s329 + $0x64] sm:$0xf]
        %v559 = vld [vmem:[%s329 + $0x68] sm:$0xf]
        %v560 = vld [vmem:[%s329 + $0x6c] sm:$0xf]
        %v561 = vld [vmem:[%s329 + $0x70] sm:$0xf]
        %v562 = vld [vmem:[%s329 + $0x74] sm:$0xf]
        %v563 = vld [vmem:[%s329 + $0x78] sm:$0xf]
        %v564 = vld [vmem:[%s329 + $0x7c] sm:$0xf]
        %v565 = vld [vmem:[#allocation2] sm:$0xff]
        %v566 = vld [vmem:[#allocation2 + $0x8] sm:$0xff]
        %v567 = vld [vmem:[#allocation2 + $0x10] sm:$0xff]
        %v568 = vld [vmem:[#allocation2 + $0x18] sm:$0xff]
        %v569 = vld [vmem:[#allocation2 + $0x20] sm:$0xff]
        %v570 = vld [vmem:[#allocation2 + $0x28] sm:$0xff]
        %v571 = vld [vmem:[#allocation2 + $0x30] sm:$0xff]
        %v572 = vld [vmem:[#allocation2 + $0x38] sm:$0xff]
        %v573 = vld [vmem:[#allocation2 + $0x40] sm:$0xff]
        %v574 = vld [vmem:[#allocation2 + $0x48] sm:$0xff]
        %v575 = vld [vmem:[#allocation2 + $0x50] sm:$0xff]
        %v576 = vld [vmem:[#allocation2 + $0x58] sm:$0xff]
        %v577 = vld [vmem:[#allocation2 + $0x60] sm:$0xff]
        %v578 = vld [vmem:[#allocation2 + $0x68] sm:$0xff]
        %v579 = vld [vmem:[#allocation2 + $0x70] sm:$0xff]
        %v580 = vld [vmem:[#allocation2 + $0x78] sm:$0xff]
        %v613 = vunpack.c.l.b16 %v533
        %v614 = vunpack.c.l.b16 %v534
        %v615 = vunpack.c.l.b16 %v535
        %v616 = vunpack.c.l.b16 %v536
        %v617 = vunpack.c.l.b16 %v537
        %v618 = vunpack.c.l.b16 %v538
        %v619 = vunpack.c.l.b16 %v539
        %v620 = vunpack.c.l.b16 %v540
        %v621 = vunpack.c.l.b16 %v541
        %v622 = vunpack.c.l.b16 %v542
        %v623 = vunpack.c.l.b16 %v543
        %v624 = vunpack.c.l.b16 %v544
        %v625 = vunpack.c.l.b16 %v545
        %v626 = vunpack.c.l.b16 %v546
        %v627 = vunpack.c.l.b16 %v547
        %v628 = vunpack.c.l.b16 %v548
        %v629 = vunpack.c.l.b16 %v549
        %v630 = vunpack.c.l.b16 %v550
        %v631 = vunpack.c.l.b16 %v551
        %v632 = vunpack.c.l.b16 %v552
        %v633 = vunpack.c.l.b16 %v553
        %v634 = vunpack.c.l.b16 %v554
        %v635 = vunpack.c.l.b16 %v555
        %v636 = vunpack.c.l.b16 %v556
        %v637 = vunpack.c.l.b16 %v557
        %v638 = vunpack.c.l.b16 %v558
        %v639 = vunpack.c.l.b16 %v559
        %v640 = vunpack.c.l.b16 %v560
        %v641 = vunpack.c.l.b16 %v561
        %v642 = vunpack.c.l.b16 %v562
        %v643 = vunpack.c.l.b16 %v563
        %v644 = vunpack.c.l.b16 %v564
        %v645 = vpack.c.b16 %v614, %v613
        %v646 = vpack.c.b16 %v616, %v615
        %v647 = vpack.c.b16 %v618, %v617
        %v648 = vpack.c.b16 %v620, %v619
        %v649 = vpack.c.b16 %v622, %v621
        %v650 = vpack.c.b16 %v624, %v623
        %v651 = vpack.c.b16 %v626, %v625
        %v652 = vpack.c.b16 %v628, %v627
        %v653 = vpack.c.b16 %v630, %v629
        %v654 = vpack.c.b16 %v632, %v631
        %v655 = vpack.c.b16 %v634, %v633
        %v656 = vpack.c.b16 %v636, %v635
        %v657 = vpack.c.b16 %v638, %v637
        %v658 = vpack.c.b16 %v640, %v639
        %v659 = vpack.c.b16 %v642, %v641
        %v660 = vpack.c.b16 %v644, %v643
        %677 = vmatprep.subr.bf16.mxu0 %v566
        %678 = vmatpush1.bf16.msra.mxu0 %v565
        %679 = vmatprep.subr.bf16.mxu0 %v568
        %680 = vmatpush1.bf16.msra.mxu0 %v567
        %681 = vmatprep.subr.bf16.mxu0 %v570
        %682 = vmatpush1.bf16.msra.mxu0 %v569
        %683 = vmatprep.subr.bf16.mxu0 %v572
        %684 = vmatpush1.bf16.msra.mxu0 %v571
        %685 = vmatprep.subr.bf16.mxu0 %v574
        %686 = vmatpush1.bf16.msra.mxu0 %v573
        %687 = vmatprep.subr.bf16.mxu0 %v576
        %688 = vmatpush1.bf16.msra.mxu0 %v575
        %689 = vmatprep.subr.bf16.mxu0 %v578
        %690 = vmatpush1.bf16.msra.mxu0 %v577
        %691 = vmatprep.subr.bf16.mxu0 %v580
        %692 = vmatpush1.bf16.msra.mxu0 %v579
        %693 = vmatprep.subr.bf16.mxu0 0
        %694 = vmatpush1.bf16.msra.mxu0 0
        %695 = vmatprep.subr.bf16.mxu0 0
        %696 = vmatpush1.bf16.msra.mxu0 0
        %697 = vmatprep.subr.bf16.mxu0 0
        %698 = vmatpush1.bf16.msra.mxu0 0
        %699 = vmatprep.subr.bf16.mxu0 0
        %700 = vmatpush1.bf16.msra.mxu0 0
        %701 = vmatprep.subr.bf16.mxu0 0
        %702 = vmatpush1.bf16.msra.mxu0 0
        %703 = vmatprep.subr.bf16.mxu0 0
        %704 = vmatpush1.bf16.msra.mxu0 0
        %705 = vmatprep.subr.bf16.mxu0 0
        %706 = vmatpush1.bf16.msra.mxu0 0
        %707 = vmatprep.subr.bf16.mxu0 0
        %708 = vmatpush1.bf16.msra.mxu0 0
        %709 = vmatprep.mubr.bf16.mxu0 0
        %710 = vmatmul.mubr.bf16.gmra.mrb[0].mxu0 %v645
        %v711 = vpop.f32.mrb[0].mxu0
        %v712 = vadd.f32 0.0, %v711
        %v713 = vpop.f32.mrb[0].mxu0
        %v714 = vadd.f32 0.0, %v713
        %v715 = vpop.f32.mrb[0].mxu0
        %v716 = vadd.f32 0.0, %v715
        %v717 = vpop.f32.mrb[0].mxu0
        %v718 = vadd.f32 0.0, %v717
        %719 = vmatprep.mubr.bf16.mxu0 0
        %720 = vmatmul.mubr.bf16.gmra.mrb[0].mxu0 %v646
        %v721 = vpop.f32.mrb[0].mxu0
        %v722 = vadd.f32 0.0, %v721
        %v723 = vpop.f32.mrb[0].mxu0
        %v724 = vadd.f32 0.0, %v723
        %v725 = vpop.f32.mrb[0].mxu0
        %v726 = vadd.f32 0.0, %v725
        %v727 = vpop.f32.mrb[0].mxu0
        %v728 = vadd.f32 0.0, %v727
        %729 = vmatprep.mubr.bf16.mxu0 0
        %730 = vmatmul.mubr.bf16.gmra.mrb[0].mxu0 %v647
        %v731 = vpop.f32.mrb[0].mxu0
        %v732 = vadd.f32 0.0, %v731
        %v733 = vpop.f32.mrb[0].mxu0
        %v734 = vadd.f32 0.0, %v733
        %v735 = vpop.f32.mrb[0].mxu0
        %v736 = vadd.f32 0.0, %v735
        %v737 = vpop.f32.mrb[0].mxu0
        %v738 = vadd.f32 0.0, %v737
        %739 = vmatprep.mubr.bf16.mxu0 0
        %740 = vmatmul.mubr.bf16.gmra.mrb[0].mxu0 %v648
        %v741 = vpop.f32.mrb[0].mxu0
        %v742 = vadd.f32 0.0, %v741
        %v743 = vpop.f32.mrb[0].mxu0
        %v744 = vadd.f32 0.0, %v743
        %v745 = vpop.f32.mrb[0].mxu0
        %v746 = vadd.f32 0.0, %v745
        %v747 = vpop.f32.mrb[0].mxu0
        %v748 = vadd.f32 0.0, %v747
        %749 = vmatprep.mubr.bf16.mxu0 0
        %750 = vmatmul.mubr.bf16.gmra.mrb[0].mxu0 %v649
        %v751 = vpop.f32.mrb[0].mxu0
        %v752 = vadd.f32 0.0, %v751
        %v753 = vpop.f32.mrb[0].mxu0
        %v754 = vadd.f32 0.0, %v753
        %v755 = vpop.f32.mrb[0].mxu0
        %v756 = vadd.f32 0.0, %v755
        %v757 = vpop.f32.mrb[0].mxu0
        %v758 = vadd.f32 0.0, %v757
        %759 = vmatprep.mubr.bf16.mxu0 0
        %760 = vmatmul.mubr.bf16.gmra.mrb[0].mxu0 %v650
        %v761 = vpop.f32.mrb[0].mxu0
        %v762 = vadd.f32 0.0, %v761
        %v763 = vpop.f32.mrb[0].mxu0
        %v764 = vadd.f32 0.0, %v763
        %v765 = vpop.f32.mrb[0].mxu0
        %v766 = vadd.f32 0.0, %v765
        %v767 = vpop.f32.mrb[0].mxu0
        %v768 = vadd.f32 0.0, %v767
        %769 = vmatprep.mubr.bf16.mxu0 0
        %770 = vmatmul.mubr.bf16.gmra.mrb[0].mxu0 %v651
        %v771 = vpop.f32.mrb[0].mxu0
        %v772 = vadd.f32 0.0, %v771
        %v773 = vpop.f32.mrb[0].mxu0
        %v774 = vadd.f32 0.0, %v773
        %v775 = vpop.f32.mrb[0].mxu0
        %v776 = vadd.f32 0.0, %v775
        %v777 = vpop.f32.mrb[0].mxu0
        %v778 = vadd.f32 0.0, %v777
        %779 = vmatprep.mubr.bf16.mxu0 0
        %780 = vmatmul.mubr.bf16.gmra.mrb[0].mxu0 %v652
        %v781 = vpop.f32.mrb[0].mxu0
        %v782 = vadd.f32 0.0, %v781
        %v783 = vpop.f32.mrb[0].mxu0
        %v784 = vadd.f32 0.0, %v783
        %v785 = vpop.f32.mrb[0].mxu0
        %v786 = vadd.f32 0.0, %v785
        %v787 = vpop.f32.mrb[0].mxu0
        %v788 = vadd.f32 0.0, %v787
        %789 = vmatprep.mubr.bf16.mxu0 0
        %790 = vmatmul.mubr.bf16.gmra.mrb[0].mxu0 %v653
        %v791 = vpop.f32.mrb[0].mxu0
        %v792 = vadd.f32 0.0, %v791
        %v793 = vpop.f32.mrb[0].mxu0
        %v794 = vadd.f32 0.0, %v793
        %v795 = vpop.f32.mrb[0].mxu0
        %v796 = vadd.f32 0.0, %v795
        %v797 = vpop.f32.mrb[0].mxu0
        %v798 = vadd.f32 0.0, %v797
        %799 = vmatprep.mubr.bf16.mxu0 0
        %800 = vmatmul.mubr.bf16.gmra.mrb[0].mxu0 %v654
        %v801 = vpop.f32.mrb[0].mxu0
        %v802 = vadd.f32 0.0, %v801
        %v803 = vpop.f32.mrb[0].mxu0
        %v804 = vadd.f32 0.0, %v803
        %v805 = vpop.f32.mrb[0].mxu0
        %v806 = vadd.f32 0.0, %v805
        %v807 = vpop.f32.mrb[0].mxu0
        %v808 = vadd.f32 0.0, %v807
        %809 = vmatprep.mubr.bf16.mxu0 0
        %810 = vmatmul.mubr.bf16.gmra.mrb[0].mxu0 %v655
        %v811 = vpop.f32.mrb[0].mxu0
        %v812 = vadd.f32 0.0, %v811
        %v813 = vpop.f32.mrb[0].mxu0
        %v814 = vadd.f32 0.0, %v813
        %v815 = vpop.f32.mrb[0].mxu0
        %v816 = vadd.f32 0.0, %v815
        %v817 = vpop.f32.mrb[0].mxu0
        %v818 = vadd.f32 0.0, %v817
        %819 = vmatprep.mubr.bf16.mxu0 0
        %820 = vmatmul.mubr.bf16.gmra.mrb[0].mxu0 %v656
        %v821 = vpop.f32.mrb[0].mxu0
        %v822 = vadd.f32 0.0, %v821
        %v823 = vpop.f32.mrb[0].mxu0
        %v824 = vadd.f32 0.0, %v823
        %v825 = vpop.f32.mrb[0].mxu0
        %v826 = vadd.f32 0.0, %v825
        %v827 = vpop.f32.mrb[0].mxu0
        %v828 = vadd.f32 0.0, %v827
        %829 = vmatprep.mubr.bf16.mxu0 0
        %830 = vmatmul.mubr.bf16.gmra.mrb[0].mxu0 %v657
        %v831 = vpop.f32.mrb[0].mxu0
        %v832 = vadd.f32 0.0, %v831
        %v833 = vpop.f32.mrb[0].mxu0
        %v834 = vadd.f32 0.0, %v833
        %v835 = vpop.f32.mrb[0].mxu0
        %v836 = vadd.f32 0.0, %v835
        %v837 = vpop.f32.mrb[0].mxu0
        %v838 = vadd.f32 0.0, %v837
        %839 = vmatprep.mubr.bf16.mxu0 0
        %840 = vmatmul.mubr.bf16.gmra.mrb[0].mxu0 %v658
        %v841 = vpop.f32.mrb[0].mxu0
        %v842 = vadd.f32 0.0, %v841
        %v843 = vpop.f32.mrb[0].mxu0
        %v844 = vadd.f32 0.0, %v843
        %v845 = vpop.f32.mrb[0].mxu0
        %v846 = vadd.f32 0.0, %v845
        %v847 = vpop.f32.mrb[0].mxu0
        %v848 = vadd.f32 0.0, %v847
        %849 = vmatprep.mubr.bf16.mxu0 0
        %850 = vmatmul.mubr.bf16.gmra.mrb[0].mxu0 %v659
        %v851 = vpop.f32.mrb[0].mxu0
        %v852 = vadd.f32 0.0, %v851
        %v853 = vpop.f32.mrb[0].mxu0
        %v854 = vadd.f32 0.0, %v853
        %v855 = vpop.f32.mrb[0].mxu0
        %v856 = vadd.f32 0.0, %v855
        %v857 = vpop.f32.mrb[0].mxu0
        %v858 = vadd.f32 0.0, %v857
        %859 = vmatprep.mubr.bf16.mxu0 0
        %860 = vmatmul.mubr.bf16.gmra.mrb[0].mxu0 %v660
        %v861 = vpop.f32.mrb[0].mxu0
        %v862 = vadd.f32 0.0, %v861
        %v863 = vpop.f32.mrb[0].mxu0
        %v864 = vadd.f32 0.0, %v863
        %v865 = vpop.f32.mrb[0].mxu0
        %v866 = vadd.f32 0.0, %v865
        %v867 = vpop.f32.mrb[0].mxu0
        %v868 = vadd.f32 0.0, %v867
        %869 = vdwg.mxu0
        %v870 = vld [vmem:[#allocation3] sm:$0xff]
        %v871 = vld [vmem:[#allocation3 + $0x8] sm:$0xff]
        %v872 = vld [vmem:[#allocation3 + $0x10] sm:$0xff]
        %v873 = vld [vmem:[#allocation3 + $0x18] sm:$0xff]
        %v874 = vld [vmem:[#allocation3 + $0x20] sm:$0xff]
        %v875 = vld [vmem:[#allocation3 + $0x28] sm:$0xff]
        %v876 = vld [vmem:[#allocation3 + $0x30] sm:$0xff]
        %v877 = vld [vmem:[#allocation3 + $0x38] sm:$0xff]
        %v878 = vld [vmem:[#allocation3 + $0x40] sm:$0xff]
        %v879 = vld [vmem:[#allocation3 + $0x48] sm:$0xff]
        %v880 = vld [vmem:[#allocation3 + $0x50] sm:$0xff]
        %v881 = vld [vmem:[#allocation3 + $0x58] sm:$0xff]
        %v882 = vld [vmem:[#allocation3 + $0x60] sm:$0xff]
        %v883 = vld [vmem:[#allocation3 + $0x68] sm:$0xff]
        %v884 = vld [vmem:[#allocation3 + $0x70] sm:$0xff]
        %v885 = vld [vmem:[#allocation3 + $0x78] sm:$0xff]
        %v886 = vld [vmem:[#allocation3 + $0x80] sm:$0xff]
        %v887 = vld [vmem:[#allocation3 + $0x88] sm:$0xff]
        %v888 = vld [vmem:[#allocation3 + $0x90] sm:$0xff]
        %v889 = vld [vmem:[#allocation3 + $0x98] sm:$0xff]
        %v890 = vld [vmem:[#allocation3 + $0xa0] sm:$0xff]
        %v891 = vld [vmem:[#allocation3 + $0xa8] sm:$0xff]
        %v892 = vld [vmem:[#allocation3 + $0xb0] sm:$0xff]
        %v893 = vld [vmem:[#allocation3 + $0xb8] sm:$0xff]
        %v894 = vld [vmem:[#allocation3 + $0xc0] sm:$0xff]
        %v895 = vld [vmem:[#allocation3 + $0xc8] sm:$0xff]
        %v896 = vld [vmem:[#allocation3 + $0xd0] sm:$0xff]
        %v897 = vld [vmem:[#allocation3 + $0xd8] sm:$0xff]
        %v898 = vld [vmem:[#allocation3 + $0xe0] sm:$0xff]
        %v899 = vld [vmem:[#allocation3 + $0xe8] sm:$0xff]
        %v900 = vld [vmem:[#allocation3 + $0xf0] sm:$0xff]
        %v901 = vld [vmem:[#allocation3 + $0xf8] sm:$0xff]
        %v902 = vmax.f32 %v712, %v714
        %903 = vmax.xlane.f32.xlu0 %v902
        %v904 = vpop.xlane.xlu0 %903
        %v905 = vmax.f32 %v716, %v718
        %906 = vmax.xlane.f32.xlu0 %v905
        %v907 = vpop.xlane.xlu0 %906
        %v908 = vmax.f32 %v722, %v724
        %909 = vmax.xlane.f32.xlu0 %v908
        %v910 = vpop.xlane.xlu0 %909
        %v911 = vmax.f32 %v726, %v728
        %912 = vmax.xlane.f32.xlu0 %v911
        %v913 = vpop.xlane.xlu0 %912
        %v914 = vmax.f32 %v732, %v734
        %915 = vmax.xlane.f32.xlu0 %v914
        %v916 = vpop.xlane.xlu0 %915
        %v917 = vmax.f32 %v736, %v738
        %918 = vmax.xlane.f32.xlu0 %v917
        %v919 = vpop.xlane.xlu0 %918
        %v920 = vmax.f32 %v742, %v744
        %921 = vmax.xlane.f32.xlu0 %v920
        %v922 = vpop.xlane.xlu0 %921
        %v923 = vmax.f32 %v746, %v748
        %924 = vmax.xlane.f32.xlu0 %v923
        %v925 = vpop.xlane.xlu0 %924
        %v926 = vmax.f32 %v752, %v754
        %927 = vmax.xlane.f32.xlu0 %v926
        %v928 = vpop.xlane.xlu0 %927
        %v929 = vmax.f32 %v756, %v758
        %930 = vmax.xlane.f32.xlu0 %v929
        %v931 = vpop.xlane.xlu0 %930
        %v932 = vmax.f32 %v762, %v764
        %933 = vmax.xlane.f32.xlu0 %v932
        %v934 = vpop.xlane.xlu0 %933
        %v935 = vmax.f32 %v766, %v768
        %936 = vmax.xlane.f32.xlu0 %v935
        %v937 = vpop.xlane.xlu0 %936
        %v938 = vmax.f32 %v772, %v774
        %939 = vmax.xlane.f32.xlu0 %v938
        %v940 = vpop.xlane.xlu0 %939
        %v941 = vmax.f32 %v776, %v778
        %942 = vmax.xlane.f32.xlu0 %v941
        %v943 = vpop.xlane.xlu0 %942
        %v944 = vmax.f32 %v782, %v784
        %945 = vmax.xlane.f32.xlu0 %v944
        %v946 = vpop.xlane.xlu0 %945
        %v947 = vmax.f32 %v786, %v788
        %948 = vmax.xlane.f32.xlu0 %v947
        %v949 = vpop.xlane.xlu0 %948
        %v950 = vmax.f32 %v792, %v794
        %951 = vmax.xlane.f32.xlu0 %v950
        %v952 = vpop.xlane.xlu0 %951
        %v953 = vmax.f32 %v796, %v798
        %954 = vmax.xlane.f32.xlu0 %v953
        %v955 = vpop.xlane.xlu0 %954
        %v956 = vmax.f32 %v802, %v804
        %957 = vmax.xlane.f32.xlu0 %v956
        %v958 = vpop.xlane.xlu0 %957
        %v959 = vmax.f32 %v806, %v808
        %960 = vmax.xlane.f32.xlu0 %v959
        %v961 = vpop.xlane.xlu0 %960
        %v962 = vmax.f32 %v812, %v814
        %963 = vmax.xlane.f32.xlu0 %v962
        %v964 = vpop.xlane.xlu0 %963
        %v965 = vmax.f32 %v816, %v818
        %966 = vmax.xlane.f32.xlu0 %v965
        %v967 = vpop.xlane.xlu0 %966
        %v968 = vmax.f32 %v822, %v824
        %969 = vmax.xlane.f32.xlu0 %v968
        %v970 = vpop.xlane.xlu0 %969
        %v971 = vmax.f32 %v826, %v828
        %972 = vmax.xlane.f32.xlu0 %v971
        %v973 = vpop.xlane.xlu0 %972
        %v974 = vmax.f32 %v832, %v834
        %975 = vmax.xlane.f32.xlu0 %v974
        %v976 = vpop.xlane.xlu0 %975
        %v977 = vmax.f32 %v836, %v838
        %978 = vmax.xlane.f32.xlu0 %v977
        %v979 = vpop.xlane.xlu0 %978
        %v980 = vmax.f32 %v842, %v844
        %981 = vmax.xlane.f32.xlu0 %v980
        %v982 = vpop.xlane.xlu0 %981
        %v983 = vmax.f32 %v846, %v848
        %984 = vmax.xlane.f32.xlu0 %v983
        %v985 = vpop.xlane.xlu0 %984
        %v986 = vmax.f32 %v852, %v854
        %987 = vmax.xlane.f32.xlu0 %v986
        %v988 = vpop.xlane.xlu0 %987
        %v989 = vmax.f32 %v856, %v858
        %990 = vmax.xlane.f32.xlu0 %v989
        %v991 = vpop.xlane.xlu0 %990
        %v992 = vmax.f32 %v862, %v864
        %993 = vmax.xlane.f32.xlu0 %v992
        %v994 = vpop.xlane.xlu0 %993
        %v995 = vmax.f32 %v866, %v868
        %996 = vmax.xlane.f32.xlu0 %v995
        %v997 = vpop.xlane.xlu0 %996
        %v998 = vmax.f32 %v870, %v904
        %v999 = vmax.f32 %v871, %v907
        %v1000 = vmax.f32 %v872, %v910
        %v1001 = vmax.f32 %v873, %v913
        %v1002 = vmax.f32 %v874, %v916
        %v1003 = vmax.f32 %v875, %v919
        %v1004 = vmax.f32 %v876, %v922
        %v1005 = vmax.f32 %v877, %v925
        %v1006 = vmax.f32 %v878, %v928
        %v1007 = vmax.f32 %v879, %v931
        %v1008 = vmax.f32 %v880, %v934
        %v1009 = vmax.f32 %v881, %v937
        %v1010 = vmax.f32 %v882, %v940
        %v1011 = vmax.f32 %v883, %v943
        %v1012 = vmax.f32 %v884, %v946
        %v1013 = vmax.f32 %v885, %v949
        %v1014 = vmax.f32 %v886, %v952
        %v1015 = vmax.f32 %v887, %v955
        %v1016 = vmax.f32 %v888, %v958
        %v1017 = vmax.f32 %v889, %v961
        %v1018 = vmax.f32 %v890, %v964
        %v1019 = vmax.f32 %v891, %v967
        %v1020 = vmax.f32 %v892, %v970
        %v1021 = vmax.f32 %v893, %v973
        %v1022 = vmax.f32 %v894, %v976
        %v1023 = vmax.f32 %v895, %v979
        %v1024 = vmax.f32 %v896, %v982
        %v1025 = vmax.f32 %v897, %v985
        %v1026 = vmax.f32 %v898, %v988
        %v1027 = vmax.f32 %v899, %v991
        %v1028 = vmax.f32 %v900, %v994
        %v1029 = vmax.f32 %v901, %v997
        %v1030 = vsub.f32 %v870, %v998
        %v1031 = vsub.f32 %v871, %v999
        %v1032 = vsub.f32 %v872, %v1000
        %v1033 = vsub.f32 %v873, %v1001
        %v1034 = vsub.f32 %v874, %v1002
        %v1035 = vsub.f32 %v875, %v1003
        %v1036 = vsub.f32 %v876, %v1004
        %v1037 = vsub.f32 %v877, %v1005
        %v1038 = vsub.f32 %v878, %v1006
        %v1039 = vsub.f32 %v879, %v1007
        %v1040 = vsub.f32 %v880, %v1008
        %v1041 = vsub.f32 %v881, %v1009
        %v1042 = vsub.f32 %v882, %v1010
        %v1043 = vsub.f32 %v883, %v1011
        %v1044 = vsub.f32 %v884, %v1012
        %v1045 = vsub.f32 %v885, %v1013
        %v1046 = vsub.f32 %v886, %v1014
        %v1047 = vsub.f32 %v887, %v1015
        %v1048 = vsub.f32 %v888, %v1016
        %v1049 = vsub.f32 %v889, %v1017
        %v1050 = vsub.f32 %v890, %v1018
        %v1051 = vsub.f32 %v891, %v1019
        %v1052 = vsub.f32 %v892, %v1020
        %v1053 = vsub.f32 %v893, %v1021
        %v1054 = vsub.f32 %v894, %v1022
        %v1055 = vsub.f32 %v895, %v1023
        %v1056 = vsub.f32 %v896, %v1024
        %v1057 = vsub.f32 %v897, %v1025
        %v1058 = vsub.f32 %v898, %v1026
        %v1059 = vsub.f32 %v899, %v1027
        %v1060 = vsub.f32 %v900, %v1028
        %v1061 = vsub.f32 %v901, %v1029
        %v1062 = vmul.f32 %v1030, 1.442695
        %v1063 = vpow.pop %v1062
        %v1064 = vmul.f32 %v1031, 1.442695
        %v1065 = vpow.pop %v1064
        %v1066 = vmul.f32 %v1032, 1.442695
        %v1067 = vpow.pop %v1066
        %v1068 = vmul.f32 %v1033, 1.442695
        %v1069 = vpow.pop %v1068
        %v1070 = vmul.f32 %v1034, 1.442695
        %v1071 = vpow.pop %v1070
        %v1072 = vmul.f32 %v1035, 1.442695
        %v1073 = vpow.pop %v1072
        %v1074 = vmul.f32 %v1036, 1.442695
        %v1075 = vpow.pop %v1074
        %v1076 = vmul.f32 %v1037, 1.442695
        %v1077 = vpow.pop %v1076
        %v1078 = vmul.f32 %v1038, 1.442695
        %v1079 = vpow.pop %v1078
        %v1080 = vmul.f32 %v1039, 1.442695
        %v1081 = vpow.pop %v1080
        %v1082 = vmul.f32 %v1040, 1.442695
        %v1083 = vpow.pop %v1082
        %v1084 = vmul.f32 %v1041, 1.442695
        %v1085 = vpow.pop %v1084
        %v1086 = vmul.f32 %v1042, 1.442695
        %v1087 = vpow.pop %v1086
        %v1088 = vmul.f32 %v1043, 1.442695
        %v1089 = vpow.pop %v1088
        %v1090 = vmul.f32 %v1044, 1.442695
        %v1091 = vpow.pop %v1090
        %v1092 = vmul.f32 %v1045, 1.442695
        %v1093 = vpow.pop %v1092
        %v1094 = vmul.f32 %v1046, 1.442695
        %v1095 = vpow.pop %v1094
        %v1096 = vmul.f32 %v1047, 1.442695
        %v1097 = vpow.pop %v1096
        %v1098 = vmul.f32 %v1048, 1.442695
        %v1099 = vpow.pop %v1098
        %v1100 = vmul.f32 %v1049, 1.442695
        %v1101 = vpow.pop %v1100
        %v1102 = vmul.f32 %v1050, 1.442695
        %v1103 = vpow.pop %v1102
        %v1104 = vmul.f32 %v1051, 1.442695
        %v1105 = vpow.pop %v1104
        %v1106 = vmul.f32 %v1052, 1.442695
        %v1107 = vpow.pop %v1106
        %v1108 = vmul.f32 %v1053, 1.442695
        %v1109 = vpow.pop %v1108
        %v1110 = vmul.f32 %v1054, 1.442695
        %v1111 = vpow.pop %v1110
        %v1112 = vmul.f32 %v1055, 1.442695
        %v1113 = vpow.pop %v1112
        %v1114 = vmul.f32 %v1056, 1.442695
        %v1115 = vpow.pop %v1114
        %v1116 = vmul.f32 %v1057, 1.442695
        %v1117 = vpow.pop %v1116
        %v1118 = vmul.f32 %v1058, 1.442695
        %v1119 = vpow.pop %v1118
        %v1120 = vmul.f32 %v1059, 1.442695
        %v1121 = vpow.pop %v1120
        %v1122 = vmul.f32 %v1060, 1.442695
        %v1123 = vpow.pop %v1122
        %v1124 = vmul.f32 %v1061, 1.442695
        %v1125 = vpow.pop %v1124
        %1127 = vset.pattern.permute.xlu0 0
        %1128 = vperm.xlu0 %1127, %v998
        %v1129 = vpop.permute.xlu0 %1128
        %1132 = vset.pattern.permute.xlu0 0
        %1133 = vperm.xlu0 %1132, %v999
        %v1134 = vpop.permute.xlu0 %1133
        %1137 = vset.pattern.permute.xlu0 0
        %1138 = vperm.xlu0 %1137, %v1000
        %v1139 = vpop.permute.xlu0 %1138
        %1142 = vset.pattern.permute.xlu0 0
        %1143 = vperm.xlu0 %1142, %v1001
        %v1144 = vpop.permute.xlu0 %1143
        %1147 = vset.pattern.permute.xlu0 0
        %1148 = vperm.xlu0 %1147, %v1002
        %v1149 = vpop.permute.xlu0 %1148
        %1152 = vset.pattern.permute.xlu0 0
        %1153 = vperm.xlu0 %1152, %v1003
        %v1154 = vpop.permute.xlu0 %1153
        %1157 = vset.pattern.permute.xlu0 0
        %1158 = vperm.xlu0 %1157, %v1004
        %v1159 = vpop.permute.xlu0 %1158
        %1162 = vset.pattern.permute.xlu0 0
        %1163 = vperm.xlu0 %1162, %v1005
        %v1164 = vpop.permute.xlu0 %1163
        %1167 = vset.pattern.permute.xlu0 0
        %1168 = vperm.xlu0 %1167, %v1006
        %v1169 = vpop.permute.xlu0 %1168
        %1172 = vset.pattern.permute.xlu0 0
        %1173 = vperm.xlu0 %1172, %v1007
        %v1174 = vpop.permute.xlu0 %1173
        %1177 = vset.pattern.permute.xlu0 0
        %1178 = vperm.xlu0 %1177, %v1008
        %v1179 = vpop.permute.xlu0 %1178
        %1182 = vset.pattern.permute.xlu0 0
        %1183 = vperm.xlu0 %1182, %v1009
        %v1184 = vpop.permute.xlu0 %1183
        %1187 = vset.pattern.permute.xlu0 0
        %1188 = vperm.xlu0 %1187, %v1010
        %v1189 = vpop.permute.xlu0 %1188
        %1192 = vset.pattern.permute.xlu0 0
        %1193 = vperm.xlu0 %1192, %v1011
        %v1194 = vpop.permute.xlu0 %1193
        %1197 = vset.pattern.permute.xlu0 0
        %1198 = vperm.xlu0 %1197, %v1012
        %v1199 = vpop.permute.xlu0 %1198
        %1202 = vset.pattern.permute.xlu0 0
        %1203 = vperm.xlu0 %1202, %v1013
        %v1204 = vpop.permute.xlu0 %1203
        %1207 = vset.pattern.permute.xlu0 0
        %1208 = vperm.xlu0 %1207, %v1014
        %v1209 = vpop.permute.xlu0 %1208
        %1212 = vset.pattern.permute.xlu0 0
        %1213 = vperm.xlu0 %1212, %v1015
        %v1214 = vpop.permute.xlu0 %1213
        %1217 = vset.pattern.permute.xlu0 0
        %1218 = vperm.xlu0 %1217, %v1016
        %v1219 = vpop.permute.xlu0 %1218
        %1222 = vset.pattern.permute.xlu0 0
        %1223 = vperm.xlu0 %1222, %v1017
        %v1224 = vpop.permute.xlu0 %1223
        %1227 = vset.pattern.permute.xlu0 0
        %1228 = vperm.xlu0 %1227, %v1018
        %v1229 = vpop.permute.xlu0 %1228
        %1232 = vset.pattern.permute.xlu0 0
        %1233 = vperm.xlu0 %1232, %v1019
        %v1234 = vpop.permute.xlu0 %1233
        %1237 = vset.pattern.permute.xlu0 0
        %1238 = vperm.xlu0 %1237, %v1020
        %v1239 = vpop.permute.xlu0 %1238
        %1242 = vset.pattern.permute.xlu0 0
        %1243 = vperm.xlu0 %1242, %v1021
        %v1244 = vpop.permute.xlu0 %1243
        %1247 = vset.pattern.permute.xlu0 0
        %1248 = vperm.xlu0 %1247, %v1022
        %v1249 = vpop.permute.xlu0 %1248
        %1252 = vset.pattern.permute.xlu0 0
        %1253 = vperm.xlu0 %1252, %v1023
        %v1254 = vpop.permute.xlu0 %1253
        %1257 = vset.pattern.permute.xlu0 0
        %1258 = vperm.xlu0 %1257, %v1024
        %v1259 = vpop.permute.xlu0 %1258
        %1262 = vset.pattern.permute.xlu0 0
        %1263 = vperm.xlu0 %1262, %v1025
        %v1264 = vpop.permute.xlu0 %1263
        %1267 = vset.pattern.permute.xlu0 0
        %1268 = vperm.xlu0 %1267, %v1026
        %v1269 = vpop.permute.xlu0 %1268
        %1272 = vset.pattern.permute.xlu0 0
        %1273 = vperm.xlu0 %1272, %v1027
        %v1274 = vpop.permute.xlu0 %1273
        %1277 = vset.pattern.permute.xlu0 0
        %1278 = vperm.xlu0 %1277, %v1028
        %v1279 = vpop.permute.xlu0 %1278
        %1282 = vset.pattern.permute.xlu0 0
        %1283 = vperm.xlu0 %1282, %v1029
        %v1284 = vpop.permute.xlu0 %1283
        %v1286 = vsub.f32 %v712, %v1129
        %v1287 = vsub.f32 %v714, %v1129
        %v1288 = vsub.f32 %v716, %v1134
        %v1289 = vsub.f32 %v718, %v1134
        %v1290 = vsub.f32 %v722, %v1139
        %v1291 = vsub.f32 %v724, %v1139
        %v1292 = vsub.f32 %v726, %v1144
        %v1293 = vsub.f32 %v728, %v1144
        %v1294 = vsub.f32 %v732, %v1149
        %v1295 = vsub.f32 %v734, %v1149
        %v1296 = vsub.f32 %v736, %v1154
        %v1297 = vsub.f32 %v738, %v1154
        %v1298 = vsub.f32 %v742, %v1159
        %v1299 = vsub.f32 %v744, %v1159
        %v1300 = vsub.f32 %v746, %v1164
        %v1301 = vsub.f32 %v748, %v1164
        %v1302 = vsub.f32 %v752, %v1169
        %v1303 = vsub.f32 %v754, %v1169
        %v1304 = vsub.f32 %v756, %v1174
        %v1305 = vsub.f32 %v758, %v1174
        %v1306 = vsub.f32 %v762, %v1179
        %v1307 = vsub.f32 %v764, %v1179
        %v1308 = vsub.f32 %v766, %v1184
        %v1309 = vsub.f32 %v768, %v1184
        %v1310 = vsub.f32 %v772, %v1189
        %v1311 = vsub.f32 %v774, %v1189
        %v1312 = vsub.f32 %v776, %v1194
        %v1313 = vsub.f32 %v778, %v1194
        %v1314 = vsub.f32 %v782, %v1199
        %v1315 = vsub.f32 %v784, %v1199
        %v1316 = vsub.f32 %v786, %v1204
        %v1317 = vsub.f32 %v788, %v1204
        %v1318 = vsub.f32 %v792, %v1209
        %v1319 = vsub.f32 %v794, %v1209
        %v1320 = vsub.f32 %v796, %v1214
        %v1321 = vsub.f32 %v798, %v1214
        %v1322 = vsub.f32 %v802, %v1219
        %v1323 = vsub.f32 %v804, %v1219
        %v1324 = vsub.f32 %v806, %v1224
        %v1325 = vsub.f32 %v808, %v1224
        %v1326 = vsub.f32 %v812, %v1229
        %v1327 = vsub.f32 %v814, %v1229
        %v1328 = vsub.f32 %v816, %v1234
        %v1329 = vsub.f32 %v818, %v1234
        %v1330 = vsub.f32 %v822, %v1239
        %v1331 = vsub.f32 %v824, %v1239
        %v1332 = vsub.f32 %v826, %v1244
        %v1333 = vsub.f32 %v828, %v1244
        %v1334 = vsub.f32 %v832, %v1249
        %v1335 = vsub.f32 %v834, %v1249
        %v1336 = vsub.f32 %v836, %v1254
        %v1337 = vsub.f32 %v838, %v1254
        %v1338 = vsub.f32 %v842, %v1259
        %v1339 = vsub.f32 %v844, %v1259
        %v1340 = vsub.f32 %v846, %v1264
        %v1341 = vsub.f32 %v848, %v1264
        %v1342 = vsub.f32 %v852, %v1269
        %v1343 = vsub.f32 %v854, %v1269
        %v1344 = vsub.f32 %v856, %v1274
        %v1345 = vsub.f32 %v858, %v1274
        %v1346 = vsub.f32 %v862, %v1279
        %v1347 = vsub.f32 %v864, %v1279
        %v1348 = vsub.f32 %v866, %v1284
        %v1349 = vsub.f32 %v868, %v1284
        %v1350 = vmul.f32 %v1286, 1.442695
        %v1351 = vpow.pop %v1350
        %v1352 = vmul.f32 %v1287, 1.442695
        %v1353 = vpow.pop %v1352
        %v1354 = vmul.f32 %v1288, 1.442695
        %v1355 = vpow.pop %v1354
        %v1356 = vmul.f32 %v1289, 1.442695
        %v1357 = vpow.pop %v1356
        %v1358 = vmul.f32 %v1290, 1.442695
        %v1359 = vpow.pop %v1358
        %v1360 = vmul.f32 %v1291, 1.442695
        %v1361 = vpow.pop %v1360
        %v1362 = vmul.f32 %v1292, 1.442695
        %v1363 = vpow.pop %v1362
        %v1364 = vmul.f32 %v1293, 1.442695
        %v1365 = vpow.pop %v1364
        %v1366 = vmul.f32 %v1294, 1.442695
        %v1367 = vpow.pop %v1366
        %v1368 = vmul.f32 %v1295, 1.442695
        %v1369 = vpow.pop %v1368
        %v1370 = vmul.f32 %v1296, 1.442695
        %v1371 = vpow.pop %v1370
        %v1372 = vmul.f32 %v1297, 1.442695
        %v1373 = vpow.pop %v1372
        %v1374 = vmul.f32 %v1298, 1.442695
        %v1375 = vpow.pop %v1374
        %v1376 = vmul.f32 %v1299, 1.442695
        %v1377 = vpow.pop %v1376
        %v1378 = vmul.f32 %v1300, 1.442695
        %v1379 = vpow.pop %v1378
        %v1380 = vmul.f32 %v1301, 1.442695
        %v1381 = vpow.pop %v1380
        %v1382 = vmul.f32 %v1302, 1.442695
        %v1383 = vpow.pop %v1382
        %v1384 = vmul.f32 %v1303, 1.442695
        %v1385 = vpow.pop %v1384
        %v1386 = vmul.f32 %v1304, 1.442695
        %v1387 = vpow.pop %v1386
        %v1388 = vmul.f32 %v1305, 1.442695
        %v1389 = vpow.pop %v1388
        %v1390 = vmul.f32 %v1306, 1.442695
        %v1391 = vpow.pop %v1390
        %v1392 = vmul.f32 %v1307, 1.442695
        %v1393 = vpow.pop %v1392
        %v1394 = vmul.f32 %v1308, 1.442695
        %v1395 = vpow.pop %v1394
        %v1396 = vmul.f32 %v1309, 1.442695
        %v1397 = vpow.pop %v1396
        %v1398 = vmul.f32 %v1310, 1.442695
        %v1399 = vpow.pop %v1398
        %v1400 = vmul.f32 %v1311, 1.442695
        %v1401 = vpow.pop %v1400
        %v1402 = vmul.f32 %v1312, 1.442695
        %v1403 = vpow.pop %v1402
        %v1404 = vmul.f32 %v1313, 1.442695
        %v1405 = vpow.pop %v1404
        %v1406 = vmul.f32 %v1314, 1.442695
        %v1407 = vpow.pop %v1406
        %v1408 = vmul.f32 %v1315, 1.442695
        %v1409 = vpow.pop %v1408
        %v1410 = vmul.f32 %v1316, 1.442695
        %v1411 = vpow.pop %v1410
        %v1412 = vmul.f32 %v1317, 1.442695
        %v1413 = vpow.pop %v1412
        %v1414 = vmul.f32 %v1318, 1.442695
        %v1415 = vpow.pop %v1414
        %v1416 = vmul.f32 %v1319, 1.442695
        %v1417 = vpow.pop %v1416
        %v1418 = vmul.f32 %v1320, 1.442695
        %v1419 = vpow.pop %v1418
        %v1420 = vmul.f32 %v1321, 1.442695
        %v1421 = vpow.pop %v1420
        %v1422 = vmul.f32 %v1322, 1.442695
        %v1423 = vpow.pop %v1422
        %v1424 = vmul.f32 %v1323, 1.442695
        %v1425 = vpow.pop %v1424
        %v1426 = vmul.f32 %v1324, 1.442695
        %v1427 = vpow.pop %v1426
        %v1428 = vmul.f32 %v1325, 1.442695
        %v1429 = vpow.pop %v1428
        %v1430 = vmul.f32 %v1326, 1.442695
        %v1431 = vpow.pop %v1430
        %v1432 = vmul.f32 %v1327, 1.442695
        %v1433 = vpow.pop %v1432
        %v1434 = vmul.f32 %v1328, 1.442695
        %v1435 = vpow.pop %v1434
        %v1436 = vmul.f32 %v1329, 1.442695
        %v1437 = vpow.pop %v1436
        %v1438 = vmul.f32 %v1330, 1.442695
        %v1439 = vpow.pop %v1438
        %v1440 = vmul.f32 %v1331, 1.442695
        %v1441 = vpow.pop %v1440
        %v1442 = vmul.f32 %v1332, 1.442695
        %v1443 = vpow.pop %v1442
        %v1444 = vmul.f32 %v1333, 1.442695
        %v1445 = vpow.pop %v1444
        %v1446 = vmul.f32 %v1334, 1.442695
        %v1447 = vpow.pop %v1446
        %v1448 = vmul.f32 %v1335, 1.442695
        %v1449 = vpow.pop %v1448
        %v1450 = vmul.f32 %v1336, 1.442695
        %v1451 = vpow.pop %v1450
        %v1452 = vmul.f32 %v1337, 1.442695
        %v1453 = vpow.pop %v1452
        %v1454 = vmul.f32 %v1338, 1.442695
        %v1455 = vpow.pop %v1454
        %v1456 = vmul.f32 %v1339, 1.442695
        %v1457 = vpow.pop %v1456
        %v1458 = vmul.f32 %v1340, 1.442695
        %v1459 = vpow.pop %v1458
        %v1460 = vmul.f32 %v1341, 1.442695
        %v1461 = vpow.pop %v1460
        %v1462 = vmul.f32 %v1342, 1.442695
        %v1463 = vpow.pop %v1462
        %v1464 = vmul.f32 %v1343, 1.442695
        %v1465 = vpow.pop %v1464
        %v1466 = vmul.f32 %v1344, 1.442695
        %v1467 = vpow.pop %v1466
        %v1468 = vmul.f32 %v1345, 1.442695
        %v1469 = vpow.pop %v1468
        %v1470 = vmul.f32 %v1346, 1.442695
        %v1471 = vpow.pop %v1470
        %v1472 = vmul.f32 %v1347, 1.442695
        %v1473 = vpow.pop %v1472
        %v1474 = vmul.f32 %v1348, 1.442695
        %v1475 = vpow.pop %v1474
        %v1476 = vmul.f32 %v1349, 1.442695
        %v1477 = vpow.pop %v1476
        %v1478 = vld [vmem:[#allocation4] sm:$0xff]
        %v1479 = vld [vmem:[#allocation4 + $0x8] sm:$0xff]
        %v1480 = vld [vmem:[#allocation4 + $0x10] sm:$0xff]
        %v1481 = vld [vmem:[#allocation4 + $0x18] sm:$0xff]
        %v1482 = vld [vmem:[#allocation4 + $0x20] sm:$0xff]
        %v1483 = vld [vmem:[#allocation4 + $0x28] sm:$0xff]
        %v1484 = vld [vmem:[#allocation4 + $0x30] sm:$0xff]
        %v1485 = vld [vmem:[#allocation4 + $0x38] sm:$0xff]
        %v1486 = vld [vmem:[#allocation4 + $0x40] sm:$0xff]
        %v1487 = vld [vmem:[#allocation4 + $0x48] sm:$0xff]
        %v1488 = vld [vmem:[#allocation4 + $0x50] sm:$0xff]
        %v1489 = vld [vmem:[#allocation4 + $0x58] sm:$0xff]
        %v1490 = vld [vmem:[#allocation4 + $0x60] sm:$0xff]
        %v1491 = vld [vmem:[#allocation4 + $0x68] sm:$0xff]
        %v1492 = vld [vmem:[#allocation4 + $0x70] sm:$0xff]
        %v1493 = vld [vmem:[#allocation4 + $0x78] sm:$0xff]
        %v1494 = vld [vmem:[#allocation4 + $0x80] sm:$0xff]
        %v1495 = vld [vmem:[#allocation4 + $0x88] sm:$0xff]
        %v1496 = vld [vmem:[#allocation4 + $0x90] sm:$0xff]
        %v1497 = vld [vmem:[#allocation4 + $0x98] sm:$0xff]
        %v1498 = vld [vmem:[#allocation4 + $0xa0] sm:$0xff]
        %v1499 = vld [vmem:[#allocation4 + $0xa8] sm:$0xff]
        %v1500 = vld [vmem:[#allocation4 + $0xb0] sm:$0xff]
        %v1501 = vld [vmem:[#allocation4 + $0xb8] sm:$0xff]
        %v1502 = vld [vmem:[#allocation4 + $0xc0] sm:$0xff]
        %v1503 = vld [vmem:[#allocation4 + $0xc8] sm:$0xff]
        %v1504 = vld [vmem:[#allocation4 + $0xd0] sm:$0xff]
        %v1505 = vld [vmem:[#allocation4 + $0xd8] sm:$0xff]
        %v1506 = vld [vmem:[#allocation4 + $0xe0] sm:$0xff]
        %v1507 = vld [vmem:[#allocation4 + $0xe8] sm:$0xff]
        %v1508 = vld [vmem:[#allocation4 + $0xf0] sm:$0xff]
        %v1509 = vld [vmem:[#allocation4 + $0xf8] sm:$0xff]
        %v1510 = vmul.f32 %v1063, %v1478
        %v1511 = vmul.f32 %v1065, %v1479
        %v1512 = vmul.f32 %v1067, %v1480
        %v1513 = vmul.f32 %v1069, %v1481
        %v1514 = vmul.f32 %v1071, %v1482
        %v1515 = vmul.f32 %v1073, %v1483
        %v1516 = vmul.f32 %v1075, %v1484
        %v1517 = vmul.f32 %v1077, %v1485
        %v1518 = vmul.f32 %v1079, %v1486
        %v1519 = vmul.f32 %v1081, %v1487
        %v1520 = vmul.f32 %v1083, %v1488
        %v1521 = vmul.f32 %v1085, %v1489
        %v1522 = vmul.f32 %v1087, %v1490
        %v1523 = vmul.f32 %v1089, %v1491
        %v1524 = vmul.f32 %v1091, %v1492
        %v1525 = vmul.f32 %v1093, %v1493
        %v1526 = vmul.f32 %v1095, %v1494
        %v1527 = vmul.f32 %v1097, %v1495
        %v1528 = vmul.f32 %v1099, %v1496
        %v1529 = vmul.f32 %v1101, %v1497
        %v1530 = vmul.f32 %v1103, %v1498
        %v1531 = vmul.f32 %v1105, %v1499
        %v1532 = vmul.f32 %v1107, %v1500
        %v1533 = vmul.f32 %v1109, %v1501
        %v1534 = vmul.f32 %v1111, %v1502
        %v1535 = vmul.f32 %v1113, %v1503
        %v1536 = vmul.f32 %v1115, %v1504
        %v1537 = vmul.f32 %v1117, %v1505
        %v1538 = vmul.f32 %v1119, %v1506
        %v1539 = vmul.f32 %v1121, %v1507
        %v1540 = vmul.f32 %v1123, %v1508
        %v1541 = vmul.f32 %v1125, %v1509
        %v1542 = vadd.f32 %v1351, %v1353
        %1543 = vadd.xlane.f32.xlu0 %v1542
        %v1544 = vpop.xlane.xlu0 %1543
        %v1545 = vadd.f32 %v1355, %v1357
        %1546 = vadd.xlane.f32.xlu0 %v1545
        %v1547 = vpop.xlane.xlu0 %1546
        %v1548 = vadd.f32 %v1359, %v1361
        %1549 = vadd.xlane.f32.xlu0 %v1548
        %v1550 = vpop.xlane.xlu0 %1549
        %v1551 = vadd.f32 %v1363, %v1365
        %1552 = vadd.xlane.f32.xlu0 %v1551
        %v1553 = vpop.xlane.xlu0 %1552
        %v1554 = vadd.f32 %v1367, %v1369
        %1555 = vadd.xlane.f32.xlu0 %v1554
        %v1556 = vpop.xlane.xlu0 %1555
        %v1557 = vadd.f32 %v1371, %v1373
        %1558 = vadd.xlane.f32.xlu0 %v1557
        %v1559 = vpop.xlane.xlu0 %1558
        %v1560 = vadd.f32 %v1375, %v1377
        %1561 = vadd.xlane.f32.xlu0 %v1560
        %v1562 = vpop.xlane.xlu0 %1561
        %v1563 = vadd.f32 %v1379, %v1381
        %1564 = vadd.xlane.f32.xlu0 %v1563
        %v1565 = vpop.xlane.xlu0 %1564
        %v1566 = vadd.f32 %v1383, %v1385
        %1567 = vadd.xlane.f32.xlu0 %v1566
        %v1568 = vpop.xlane.xlu0 %1567
        %v1569 = vadd.f32 %v1387, %v1389
        %1570 = vadd.xlane.f32.xlu0 %v1569
        %v1571 = vpop.xlane.xlu0 %1570
        %v1572 = vadd.f32 %v1391, %v1393
        %1573 = vadd.xlane.f32.xlu0 %v1572
        %v1574 = vpop.xlane.xlu0 %1573
        %v1575 = vadd.f32 %v1395, %v1397
        %1576 = vadd.xlane.f32.xlu0 %v1575
        %v1577 = vpop.xlane.xlu0 %1576
        %v1578 = vadd.f32 %v1399, %v1401
        %1579 = vadd.xlane.f32.xlu0 %v1578
        %v1580 = vpop.xlane.xlu0 %1579
        %v1581 = vadd.f32 %v1403, %v1405
        %1582 = vadd.xlane.f32.xlu0 %v1581
        %v1583 = vpop.xlane.xlu0 %1582
        %v1584 = vadd.f32 %v1407, %v1409
        %1585 = vadd.xlane.f32.xlu0 %v1584
        %v1586 = vpop.xlane.xlu0 %1585
        %v1587 = vadd.f32 %v1411, %v1413
        %1588 = vadd.xlane.f32.xlu0 %v1587
        %v1589 = vpop.xlane.xlu0 %1588
        %v1590 = vadd.f32 %v1415, %v1417
        %1591 = vadd.xlane.f32.xlu0 %v1590
        %v1592 = vpop.xlane.xlu0 %1591
        %v1593 = vadd.f32 %v1419, %v1421
        %1594 = vadd.xlane.f32.xlu0 %v1593
        %v1595 = vpop.xlane.xlu0 %1594
        %v1596 = vadd.f32 %v1423, %v1425
        %1597 = vadd.xlane.f32.xlu0 %v1596
        %v1598 = vpop.xlane.xlu0 %1597
        %v1599 = vadd.f32 %v1427, %v1429
        %1600 = vadd.xlane.f32.xlu0 %v1599
        %v1601 = vpop.xlane.xlu0 %1600
        %v1602 = vadd.f32 %v1431, %v1433
        %1603 = vadd.xlane.f32.xlu0 %v1602
        %v1604 = vpop.xlane.xlu0 %1603
        %v1605 = vadd.f32 %v1435, %v1437
        %1606 = vadd.xlane.f32.xlu0 %v1605
        %v1607 = vpop.xlane.xlu0 %1606
        %v1608 = vadd.f32 %v1439, %v1441
        %1609 = vadd.xlane.f32.xlu0 %v1608
        %v1610 = vpop.xlane.xlu0 %1609
        %v1611 = vadd.f32 %v1443, %v1445
        %1612 = vadd.xlane.f32.xlu0 %v1611
        %v1613 = vpop.xlane.xlu0 %1612
        %v1614 = vadd.f32 %v1447, %v1449
        %1615 = vadd.xlane.f32.xlu0 %v1614
        %v1616 = vpop.xlane.xlu0 %1615
        %v1617 = vadd.f32 %v1451, %v1453
        %1618 = vadd.xlane.f32.xlu0 %v1617
        %v1619 = vpop.xlane.xlu0 %1618
        %v1620 = vadd.f32 %v1455, %v1457
        %1621 = vadd.xlane.f32.xlu0 %v1620
        %v1622 = vpop.xlane.xlu0 %1621
        %v1623 = vadd.f32 %v1459, %v1461
        %1624 = vadd.xlane.f32.xlu0 %v1623
        %v1625 = vpop.xlane.xlu0 %1624
        %v1626 = vadd.f32 %v1463, %v1465
        %1627 = vadd.xlane.f32.xlu0 %v1626
        %v1628 = vpop.xlane.xlu0 %1627
        %v1629 = vadd.f32 %v1467, %v1469
        %1630 = vadd.xlane.f32.xlu0 %v1629
        %v1631 = vpop.xlane.xlu0 %1630
        %v1632 = vadd.f32 %v1471, %v1473
        %1633 = vadd.xlane.f32.xlu0 %v1632
        %v1634 = vpop.xlane.xlu0 %1633
        %v1635 = vadd.f32 %v1475, %v1477
        %1636 = vadd.xlane.f32.xlu0 %v1635
        %v1637 = vpop.xlane.xlu0 %1636
        %v1638 = vadd.f32 %v1510, %v1544
        %v1639 = vadd.f32 %v1511, %v1547
        %v1640 = vadd.f32 %v1512, %v1550
        %v1641 = vadd.f32 %v1513, %v1553
        %v1642 = vadd.f32 %v1514, %v1556
        %v1643 = vadd.f32 %v1515, %v1559
        %v1644 = vadd.f32 %v1516, %v1562
        %v1645 = vadd.f32 %v1517, %v1565
        %v1646 = vadd.f32 %v1518, %v1568
        %v1647 = vadd.f32 %v1519, %v1571
        %v1648 = vadd.f32 %v1520, %v1574
        %v1649 = vadd.f32 %v1521, %v1577
        %v1650 = vadd.f32 %v1522, %v1580
        %v1651 = vadd.f32 %v1523, %v1583
        %v1652 = vadd.f32 %v1524, %v1586
        %v1653 = vadd.f32 %v1525, %v1589
        %v1654 = vadd.f32 %v1526, %v1592
        %v1655 = vadd.f32 %v1527, %v1595
        %v1656 = vadd.f32 %v1528, %v1598
        %v1657 = vadd.f32 %v1529, %v1601
        %v1658 = vadd.f32 %v1530, %v1604
        %v1659 = vadd.f32 %v1531, %v1607
        %v1660 = vadd.f32 %v1532, %v1610
        %v1661 = vadd.f32 %v1533, %v1613
        %v1662 = vadd.f32 %v1534, %v1616
        %v1663 = vadd.f32 %v1535, %v1619
        %v1664 = vadd.f32 %v1536, %v1622
        %v1665 = vadd.f32 %v1537, %v1625
        %v1666 = vadd.f32 %v1538, %v1628
        %v1667 = vadd.f32 %v1539, %v1631
        %v1668 = vadd.f32 %v1540, %v1634
        %v1669 = vadd.f32 %v1541, %v1637
        %vm1670 = vcmask 7168
        %1671 = vst.msk [vmem:[#allocation4] sm:$0xff] %vm1670, %v1638
        %1672 = vst.msk [vmem:[#allocation4 + $0x8] sm:$0xff] %vm1670, %v1639
        %1673 = vst.msk [vmem:[#allocation4 + $0x10] sm:$0xff] %vm1670, %v1640
        %1674 = vst.msk [vmem:[#allocation4 + $0x18] sm:$0xff] %vm1670, %v1641
        %1675 = vst.msk [vmem:[#allocation4 + $0x20] sm:$0xff] %vm1670, %v1642
        %1676 = vst.msk [vmem:[#allocation4 + $0x28] sm:$0xff] %vm1670, %v1643
        %1677 = vst.msk [vmem:[#allocation4 + $0x30] sm:$0xff] %vm1670, %v1644
        %1678 = vst.msk [vmem:[#allocation4 + $0x38] sm:$0xff] %vm1670, %v1645
        %1679 = vst.msk [vmem:[#allocation4 + $0x40] sm:$0xff] %vm1670, %v1646
        %1680 = vst.msk [vmem:[#allocation4 + $0x48] sm:$0xff] %vm1670, %v1647
        %1681 = vst.msk [vmem:[#allocation4 + $0x50] sm:$0xff] %vm1670, %v1648
        %1682 = vst.msk [vmem:[#allocation4 + $0x58] sm:$0xff] %vm1670, %v1649
        %1683 = vst.msk [vmem:[#allocation4 + $0x60] sm:$0xff] %vm1670, %v1650
        %1684 = vst.msk [vmem:[#allocation4 + $0x68] sm:$0xff] %vm1670, %v1651
        %1685 = vst.msk [vmem:[#allocation4 + $0x70] sm:$0xff] %vm1670, %v1652
        %1686 = vst.msk [vmem:[#allocation4 + $0x78] sm:$0xff] %vm1670, %v1653
        %1687 = vst.msk [vmem:[#allocation4 + $0x80] sm:$0xff] %vm1670, %v1654
        %1688 = vst.msk [vmem:[#allocation4 + $0x88] sm:$0xff] %vm1670, %v1655
        %1689 = vst.msk [vmem:[#allocation4 + $0x90] sm:$0xff] %vm1670, %v1656
        %1690 = vst.msk [vmem:[#allocation4 + $0x98] sm:$0xff] %vm1670, %v1657
        %1691 = vst.msk [vmem:[#allocation4 + $0xa0] sm:$0xff] %vm1670, %v1658
        %1692 = vst.msk [vmem:[#allocation4 + $0xa8] sm:$0xff] %vm1670, %v1659
        %1693 = vst.msk [vmem:[#allocation4 + $0xb0] sm:$0xff] %vm1670, %v1660
        %1694 = vst.msk [vmem:[#allocation4 + $0xb8] sm:$0xff] %vm1670, %v1661
        %1695 = vst.msk [vmem:[#allocation4 + $0xc0] sm:$0xff] %vm1670, %v1662
        %1696 = vst.msk [vmem:[#allocation4 + $0xc8] sm:$0xff] %vm1670, %v1663
        %1697 = vst.msk [vmem:[#allocation4 + $0xd0] sm:$0xff] %vm1670, %v1664
        %1698 = vst.msk [vmem:[#allocation4 + $0xd8] sm:$0xff] %vm1670, %v1665
        %1699 = vst.msk [vmem:[#allocation4 + $0xe0] sm:$0xff] %vm1670, %v1666
        %1700 = vst.msk [vmem:[#allocation4 + $0xe8] sm:$0xff] %vm1670, %v1667
        %1701 = vst.msk [vmem:[#allocation4 + $0xf0] sm:$0xff] %vm1670, %v1668
        %1702 = vst.msk [vmem:[#allocation4 + $0xf8] sm:$0xff] %vm1670, %v1669
        %v1703 = vpack.c.bf16 %v1355, %v1351
        %v1704 = vpack.c.bf16 %v1357, %v1353
        %v1705 = vpack.c.bf16 %v1363, %v1359
        %v1706 = vpack.c.bf16 %v1365, %v1361
        %v1707 = vpack.c.bf16 %v1371, %v1367
        %v1708 = vpack.c.bf16 %v1373, %v1369
        %v1709 = vpack.c.bf16 %v1379, %v1375
        %v1710 = vpack.c.bf16 %v1381, %v1377
        %v1711 = vpack.c.bf16 %v1387, %v1383
        %v1712 = vpack.c.bf16 %v1389, %v1385
        %v1713 = vpack.c.bf16 %v1395, %v1391
        %v1714 = vpack.c.bf16 %v1397, %v1393
        %v1715 = vpack.c.bf16 %v1403, %v1399
        %v1716 = vpack.c.bf16 %v1405, %v1401
        %v1717 = vpack.c.bf16 %v1411, %v1407
        %v1718 = vpack.c.bf16 %v1413, %v1409
        %v1719 = vpack.c.bf16 %v1419, %v1415
        %v1720 = vpack.c.bf16 %v1421, %v1417
        %v1721 = vpack.c.bf16 %v1427, %v1423
        %v1722 = vpack.c.bf16 %v1429, %v1425
        %v1723 = vpack.c.bf16 %v1435, %v1431
        %v1724 = vpack.c.bf16 %v1437, %v1433
        %v1725 = vpack.c.bf16 %v1443, %v1439
        %v1726 = vpack.c.bf16 %v1445, %v1441
        %v1727 = vpack.c.bf16 %v1451, %v1447
        %v1728 = vpack.c.bf16 %v1453, %v1449
        %v1729 = vpack.c.bf16 %v1459, %v1455
        %v1730 = vpack.c.bf16 %v1461, %v1457
        %v1731 = vpack.c.bf16 %v1467, %v1463
        %v1732 = vpack.c.bf16 %v1469, %v1465
        %v1733 = vpack.c.bf16 %v1475, %v1471
        %v1734 = vpack.c.bf16 %v1477, %v1473
        %v1735 = vld [vmem:[%s347] sm:$0xff]
        %v1736 = vld [vmem:[%s347 + $0x8] sm:$0xff]
        %v1737 = vld [vmem:[%s347 + $0x10] sm:$0xff]
        %v1738 = vld [vmem:[%s347 + $0x18] sm:$0xff]
        %v1739 = vld [vmem:[%s347 + $0x20] sm:$0xff]
        %v1740 = vld [vmem:[%s347 + $0x28] sm:$0xff]
        %v1741 = vld [vmem:[%s347 + $0x30] sm:$0xff]
        %v1742 = vld [vmem:[%s347 + $0x38] sm:$0xff]
        %v1743 = vld [vmem:[%s347 + $0x40] sm:$0xff]
        %v1744 = vld [vmem:[%s347 + $0x48] sm:$0xff]
        %v1745 = vld [vmem:[%s347 + $0x50] sm:$0xff]
        %v1746 = vld [vmem:[%s347 + $0x58] sm:$0xff]
        %v1747 = vld [vmem:[%s347 + $0x60] sm:$0xff]
        %v1748 = vld [vmem:[%s347 + $0x68] sm:$0xff]
        %v1749 = vld [vmem:[%s347 + $0x70] sm:$0xff]
        %v1750 = vld [vmem:[%s347 + $0x78] sm:$0xff]
        %v1767 = vunpack.c.l.b16 %v1735
        %v1768 = vunpack.c.h.b16 %v1735
        %v1769 = vunpack.c.l.b16 %v1736
        %v1770 = vunpack.c.h.b16 %v1736
        %v1771 = vunpack.c.l.b16 %v1737
        %v1772 = vunpack.c.h.b16 %v1737
        %v1773 = vunpack.c.l.b16 %v1738
        %v1774 = vunpack.c.h.b16 %v1738
        %v1775 = vunpack.c.l.b16 %v1739
        %v1776 = vunpack.c.h.b16 %v1739
        %v1777 = vunpack.c.l.b16 %v1740
        %v1778 = vunpack.c.h.b16 %v1740
        %v1779 = vunpack.c.l.b16 %v1741
        %v1780 = vunpack.c.h.b16 %v1741
        %v1781 = vunpack.c.l.b16 %v1742
        %v1782 = vunpack.c.h.b16 %v1742
        %v1783 = vunpack.c.l.b16 %v1743
        %v1784 = vunpack.c.h.b16 %v1743
        %v1785 = vunpack.c.l.b16 %v1744
        %v1786 = vunpack.c.h.b16 %v1744
        %v1787 = vunpack.c.l.b16 %v1745
        %v1788 = vunpack.c.h.b16 %v1745
        %v1789 = vunpack.c.l.b16 %v1746
        %v1790 = vunpack.c.h.b16 %v1746
        %v1791 = vunpack.c.l.b16 %v1747
        %v1792 = vunpack.c.h.b16 %v1747
        %v1793 = vunpack.c.l.b16 %v1748
        %v1794 = vunpack.c.h.b16 %v1748
        %v1795 = vunpack.c.l.b16 %v1749
        %v1796 = vunpack.c.h.b16 %v1749
        %v1797 = vunpack.c.l.b16 %v1750
        %v1798 = vunpack.c.h.b16 %v1750
        %v1799 = vpack.c.b16 %v1769, %v1767
        %v1800 = vpack.c.b16 %v1770, %v1768
        %v1801 = vpack.c.b16 %v1773, %v1771
        %v1802 = vpack.c.b16 %v1774, %v1772
        %v1803 = vpack.c.b16 %v1777, %v1775
        %v1804 = vpack.c.b16 %v1778, %v1776
        %v1805 = vpack.c.b16 %v1781, %v1779
        %v1806 = vpack.c.b16 %v1782, %v1780
        %v1807 = vpack.c.b16 %v1785, %v1783
        %v1808 = vpack.c.b16 %v1786, %v1784
        %v1809 = vpack.c.b16 %v1789, %v1787
        %v1810 = vpack.c.b16 %v1790, %v1788
        %v1811 = vpack.c.b16 %v1793, %v1791
        %v1812 = vpack.c.b16 %v1794, %v1792
        %v1813 = vpack.c.b16 %v1797, %v1795
        %v1814 = vpack.c.b16 %v1798, %v1796
        %1831 = vmatprep.subr.bf16.mxu0 %v1800
        %1832 = vmatpush1.bf16.xpose.msra.mxu0 %v1799
        %1833 = vmatprep.subr.bf16.mxu0 %v1802
        %1834 = vmatpush1.bf16.xpose.msra.mxu0 %v1801
        %1835 = vmatprep.subr.bf16.mxu0 %v1804
        %1836 = vmatpush1.bf16.xpose.msra.mxu0 %v1803
        %1837 = vmatprep.subr.bf16.mxu0 %v1806
        %1838 = vmatpush1.bf16.xpose.msra.mxu0 %v1805
        %1839 = vmatprep.subr.bf16.mxu0 %v1808
        %1840 = vmatpush1.bf16.xpose.msra.mxu0 %v1807
        %1841 = vmatprep.subr.bf16.mxu0 %v1810
        %1842 = vmatpush1.bf16.xpose.msra.mxu0 %v1809
        %1843 = vmatprep.subr.bf16.mxu0 %v1812
        %1844 = vmatpush1.bf16.xpose.msra.mxu0 %v1811
        %1845 = vmatprep.subr.bf16.mxu0 %v1814
        %1846 = vmatpush1.bf16.xpose.msra.mxu0 %v1813
        %1847 = vmatprep.subr.bf16.mxu0 0
        %1848 = vmatpush1.bf16.xpose.msra.mxu0 0
        %1849 = vmatprep.subr.bf16.mxu0 0
        %1850 = vmatpush1.bf16.xpose.msra.mxu0 0
        %1851 = vmatprep.subr.bf16.mxu0 0
        %1852 = vmatpush1.bf16.xpose.msra.mxu0 0
        %1853 = vmatprep.subr.bf16.mxu0 0
        %1854 = vmatpush1.bf16.xpose.msra.mxu0 0
        %1855 = vmatprep.subr.bf16.mxu0 0
        %1856 = vmatpush1.bf16.xpose.msra.mxu0 0
        %1857 = vmatprep.subr.bf16.mxu0 0
        %1858 = vmatpush1.bf16.xpose.msra.mxu0 0
        %1859 = vmatprep.subr.bf16.mxu0 0
        %1860 = vmatpush1.bf16.xpose.msra.mxu0 0
        %1861 = vmatprep.subr.bf16.mxu0 0
        %1862 = vmatpush1.bf16.xpose.msra.mxu0 0
        %1863 = vmatprep.mubr.bf16.mxu0 %v1704
        %1864 = vmatmul.mubr.bf16.gmra.mrb[0].mxu0 %v1703
        %v1865 = vpop.f32.mrb[0].mxu0
        %v1866 = vadd.f32 0.0, %v1865
        %v1867 = vpop.f32.mrb[0].mxu0
        %v1868 = vpop.f32.mrb[0].mxu0
        %v1869 = vadd.f32 0.0, %v1868
        %v1870 = vpop.f32.mrb[0].mxu0
        %1871 = vmatprep.mubr.bf16.mxu0 %v1706
        %1872 = vmatmul.mubr.bf16.gmra.mrb[0].mxu0 %v1705
        %v1873 = vpop.f32.mrb[0].mxu0
        %v1874 = vadd.f32 0.0, %v1873
        %v1875 = vpop.f32.mrb[0].mxu0
        %v1876 = vpop.f32.mrb[0].mxu0
        %v1877 = vadd.f32 0.0, %v1876
        %v1878 = vpop.f32.mrb[0].mxu0
        %1879 = vmatprep.mubr.bf16.mxu0 %v1708
        %1880 = vmatmul.mubr.bf16.gmra.mrb[0].mxu0 %v1707
        %v1881 = vpop.f32.mrb[0].mxu0
        %v1882 = vadd.f32 0.0, %v1881
        %v1883 = vpop.f32.mrb[0].mxu0
        %v1884 = vpop.f32.mrb[0].mxu0
        %v1885 = vadd.f32 0.0, %v1884
        %v1886 = vpop.f32.mrb[0].mxu0
        %1887 = vmatprep.mubr.bf16.mxu0 %v1710
        %1888 = vmatmul.mubr.bf16.gmra.mrb[0].mxu0 %v1709
        %v1889 = vpop.f32.mrb[0].mxu0
        %v1890 = vadd.f32 0.0, %v1889
        %v1891 = vpop.f32.mrb[0].mxu0
        %v1892 = vpop.f32.mrb[0].mxu0
        %v1893 = vadd.f32 0.0, %v1892
        %v1894 = vpop.f32.mrb[0].mxu0
        %1895 = vmatprep.mubr.bf16.mxu0 %v1712
        %1896 = vmatmul.mubr.bf16.gmra.mrb[0].mxu0 %v1711
        %v1897 = vpop.f32.mrb[0].mxu0
        %v1898 = vadd.f32 0.0, %v1897
        %v1899 = vpop.f32.mrb[0].mxu0
        %v1900 = vpop.f32.mrb[0].mxu0
        %v1901 = vadd.f32 0.0, %v1900
        %v1902 = vpop.f32.mrb[0].mxu0
        %1903 = vmatprep.mubr.bf16.mxu0 %v1714
        %1904 = vmatmul.mubr.bf16.gmra.mrb[0].mxu0 %v1713
        %v1905 = vpop.f32.mrb[0].mxu0
        %v1906 = vadd.f32 0.0, %v1905
        %v1907 = vpop.f32.mrb[0].mxu0
        %v1908 = vpop.f32.mrb[0].mxu0
        %v1909 = vadd.f32 0.0, %v1908
        %v1910 = vpop.f32.mrb[0].mxu0
        %1911 = vmatprep.mubr.bf16.mxu0 %v1716
        %1912 = vmatmul.mubr.bf16.gmra.mrb[0].mxu0 %v1715
        %v1913 = vpop.f32.mrb[0].mxu0
        %v1914 = vadd.f32 0.0, %v1913
        %v1915 = vpop.f32.mrb[0].mxu0
        %v1916 = vpop.f32.mrb[0].mxu0
        %v1917 = vadd.f32 0.0, %v1916
        %v1918 = vpop.f32.mrb[0].mxu0
        %1919 = vmatprep.mubr.bf16.mxu0 %v1718
        %1920 = vmatmul.mubr.bf16.gmra.mrb[0].mxu0 %v1717
        %v1921 = vpop.f32.mrb[0].mxu0
        %v1922 = vadd.f32 0.0, %v1921
        %v1923 = vpop.f32.mrb[0].mxu0
        %v1924 = vpop.f32.mrb[0].mxu0
        %v1925 = vadd.f32 0.0, %v1924
        %v1926 = vpop.f32.mrb[0].mxu0
        %1927 = vmatprep.mubr.bf16.mxu0 %v1720
        %1928 = vmatmul.mubr.bf16.gmra.mrb[0].mxu0 %v1719
        %v1929 = vpop.f32.mrb[0].mxu0
        %v1930 = vadd.f32 0.0, %v1929
        %v1931 = vpop.f32.mrb[0].mxu0
        %v1932 = vpop.f32.mrb[0].mxu0
        %v1933 = vadd.f32 0.0, %v1932
        %v1934 = vpop.f32.mrb[0].mxu0
        %1935 = vmatprep.mubr.bf16.mxu0 %v1722
        %1936 = vmatmul.mubr.bf16.gmra.mrb[0].mxu0 %v1721
        %v1937 = vpop.f32.mrb[0].mxu0
        %v1938 = vadd.f32 0.0, %v1937
        %v1939 = vpop.f32.mrb[0].mxu0
        %v1940 = vpop.f32.mrb[0].mxu0
        %v1941 = vadd.f32 0.0, %v1940
        %v1942 = vpop.f32.mrb[0].mxu0
        %1943 = vmatprep.mubr.bf16.mxu0 %v1724
        %1944 = vmatmul.mubr.bf16.gmra.mrb[0].mxu0 %v1723
        %v1945 = vpop.f32.mrb[0].mxu0
        %v1946 = vadd.f32 0.0, %v1945
        %v1947 = vpop.f32.mrb[0].mxu0
        %v1948 = vpop.f32.mrb[0].mxu0
        %v1949 = vadd.f32 0.0, %v1948
        %v1950 = vpop.f32.mrb[0].mxu0
        %1951 = vmatprep.mubr.bf16.mxu0 %v1726
        %1952 = vmatmul.mubr.bf16.gmra.mrb[0].mxu0 %v1725
        %v1953 = vpop.f32.mrb[0].mxu0
        %v1954 = vadd.f32 0.0, %v1953
        %v1955 = vpop.f32.mrb[0].mxu0
        %v1956 = vpop.f32.mrb[0].mxu0
        %v1957 = vadd.f32 0.0, %v1956
        %v1958 = vpop.f32.mrb[0].mxu0
        %1959 = vmatprep.mubr.bf16.mxu0 %v1728
        %1960 = vmatmul.mubr.bf16.gmra.mrb[0].mxu0 %v1727
        %v1961 = vpop.f32.mrb[0].mxu0
        %v1962 = vadd.f32 0.0, %v1961
        %v1963 = vpop.f32.mrb[0].mxu0
        %v1964 = vpop.f32.mrb[0].mxu0
        %v1965 = vadd.f32 0.0, %v1964
        %v1966 = vpop.f32.mrb[0].mxu0
        %1967 = vmatprep.mubr.bf16.mxu0 %v1730
        %1968 = vmatmul.mubr.bf16.gmra.mrb[0].mxu0 %v1729
        %v1969 = vpop.f32.mrb[0].mxu0
        %v1970 = vadd.f32 0.0, %v1969
        %v1971 = vpop.f32.mrb[0].mxu0
        %v1972 = vpop.f32.mrb[0].mxu0
        %v1973 = vadd.f32 0.0, %v1972
        %v1974 = vpop.f32.mrb[0].mxu0
        %1975 = vmatprep.mubr.bf16.mxu0 %v1732
        %1976 = vmatmul.mubr.bf16.gmra.mrb[0].mxu0 %v1731
        %v1977 = vpop.f32.mrb[0].mxu0
        %v1978 = vadd.f32 0.0, %v1977
        %v1979 = vpop.f32.mrb[0].mxu0
        %v1980 = vpop.f32.mrb[0].mxu0
        %v1981 = vadd.f32 0.0, %v1980
        %v1982 = vpop.f32.mrb[0].mxu0
        %1983 = vmatprep.mubr.bf16.mxu0 %v1734
        %1984 = vmatmul.mubr.bf16.gmra.mrb[0].mxu0 %v1733
        %v1985 = vpop.f32.mrb[0].mxu0
        %v1986 = vadd.f32 0.0, %v1985
        %v1987 = vpop.f32.mrb[0].mxu0
        %v1988 = vpop.f32.mrb[0].mxu0
        %v1989 = vadd.f32 0.0, %v1988
        %v1990 = vpop.f32.mrb[0].mxu0
        %1991 = vdwg.mxu0
        %v1992 = vld [vmem:[#allocation5] sm:$0xff]
        %v1993 = vld [vmem:[#allocation5 + $0x8] sm:$0xff]
        %v1994 = vld [vmem:[#allocation5 + $0x10] sm:$0xff]
        %v1995 = vld [vmem:[#allocation5 + $0x18] sm:$0xff]
        %v1996 = vld [vmem:[#allocation5 + $0x20] sm:$0xff]
        %v1997 = vld [vmem:[#allocation5 + $0x28] sm:$0xff]
        %v1998 = vld [vmem:[#allocation5 + $0x30] sm:$0xff]
        %v1999 = vld [vmem:[#allocation5 + $0x38] sm:$0xff]
        %v2000 = vld [vmem:[#allocation5 + $0x40] sm:$0xff]
        %v2001 = vld [vmem:[#allocation5 + $0x48] sm:$0xff]
        %v2002 = vld [vmem:[#allocation5 + $0x50] sm:$0xff]
        %v2003 = vld [vmem:[#allocation5 + $0x58] sm:$0xff]
        %v2004 = vld [vmem:[#allocation5 + $0x60] sm:$0xff]
        %v2005 = vld [vmem:[#allocation5 + $0x68] sm:$0xff]
        %v2006 = vld [vmem:[#allocation5 + $0x70] sm:$0xff]
        %v2007 = vld [vmem:[#allocation5 + $0x78] sm:$0xff]
        %v2008 = vld [vmem:[#allocation5 + $0x80] sm:$0xff]
        %v2009 = vld [vmem:[#allocation5 + $0x88] sm:$0xff]
        %v2010 = vld [vmem:[#allocation5 + $0x90] sm:$0xff]
        %v2011 = vld [vmem:[#allocation5 + $0x98] sm:$0xff]
        %v2012 = vld [vmem:[#allocation5 + $0xa0] sm:$0xff]
        %v2013 = vld [vmem:[#allocation5 + $0xa8] sm:$0xff]
        %v2014 = vld [vmem:[#allocation5 + $0xb0] sm:$0xff]
        %v2015 = vld [vmem:[#allocation5 + $0xb8] sm:$0xff]
        %v2016 = vld [vmem:[#allocation5 + $0xc0] sm:$0xff]
        %v2017 = vld [vmem:[#allocation5 + $0xc8] sm:$0xff]
        %v2018 = vld [vmem:[#allocation5 + $0xd0] sm:$0xff]
        %v2019 = vld [vmem:[#allocation5 + $0xd8] sm:$0xff]
        %v2020 = vld [vmem:[#allocation5 + $0xe0] sm:$0xff]
        %v2021 = vld [vmem:[#allocation5 + $0xe8] sm:$0xff]
        %v2022 = vld [vmem:[#allocation5 + $0xf0] sm:$0xff]
        %v2023 = vld [vmem:[#allocation5 + $0xf8] sm:$0xff]
        %2025 = vset.pattern.permute.xlu0 0
        %2026 = vperm.xlu0 %2025, %v1063
        %v2027 = vpop.permute.xlu0 %2026
        %2030 = vset.pattern.permute.xlu0 0
        %2031 = vperm.xlu0 %2030, %v1065
        %v2032 = vpop.permute.xlu0 %2031
        %2035 = vset.pattern.permute.xlu0 0
        %2036 = vperm.xlu0 %2035, %v1067
        %v2037 = vpop.permute.xlu0 %2036
        %2040 = vset.pattern.permute.xlu0 0
        %2041 = vperm.xlu0 %2040, %v1069
        %v2042 = vpop.permute.xlu0 %2041
        %2045 = vset.pattern.permute.xlu0 0
        %2046 = vperm.xlu0 %2045, %v1071
        %v2047 = vpop.permute.xlu0 %2046
        %2050 = vset.pattern.permute.xlu0 0
        %2051 = vperm.xlu0 %2050, %v1073
        %v2052 = vpop.permute.xlu0 %2051
        %2055 = vset.pattern.permute.xlu0 0
        %2056 = vperm.xlu0 %2055, %v1075
        %v2057 = vpop.permute.xlu0 %2056
        %2060 = vset.pattern.permute.xlu0 0
        %2061 = vperm.xlu0 %2060, %v1077
        %v2062 = vpop.permute.xlu0 %2061
        %2065 = vset.pattern.permute.xlu0 0
        %2066 = vperm.xlu0 %2065, %v1079
        %v2067 = vpop.permute.xlu0 %2066
        %2070 = vset.pattern.permute.xlu0 0
        %2071 = vperm.xlu0 %2070, %v1081
        %v2072 = vpop.permute.xlu0 %2071
        %2075 = vset.pattern.permute.xlu0 0
        %2076 = vperm.xlu0 %2075, %v1083
        %v2077 = vpop.permute.xlu0 %2076
        %2080 = vset.pattern.permute.xlu0 0
        %2081 = vperm.xlu0 %2080, %v1085
        %v2082 = vpop.permute.xlu0 %2081
        %2085 = vset.pattern.permute.xlu0 0
        %2086 = vperm.xlu0 %2085, %v1087
        %v2087 = vpop.permute.xlu0 %2086
        %2090 = vset.pattern.permute.xlu0 0
        %2091 = vperm.xlu0 %2090, %v1089
        %v2092 = vpop.permute.xlu0 %2091
        %2095 = vset.pattern.permute.xlu0 0
        %2096 = vperm.xlu0 %2095, %v1091
        %v2097 = vpop.permute.xlu0 %2096
        %2100 = vset.pattern.permute.xlu0 0
        %2101 = vperm.xlu0 %2100, %v1093
        %v2102 = vpop.permute.xlu0 %2101
        %2105 = vset.pattern.permute.xlu0 0
        %2106 = vperm.xlu0 %2105, %v1095
        %v2107 = vpop.permute.xlu0 %2106
        %2110 = vset.pattern.permute.xlu0 0
        %2111 = vperm.xlu0 %2110, %v1097
        %v2112 = vpop.permute.xlu0 %2111
        %2115 = vset.pattern.permute.xlu0 0
        %2116 = vperm.xlu0 %2115, %v1099
        %v2117 = vpop.permute.xlu0 %2116
        %2120 = vset.pattern.permute.xlu0 0
        %2121 = vperm.xlu0 %2120, %v1101
        %v2122 = vpop.permute.xlu0 %2121
        %2125 = vset.pattern.permute.xlu0 0
        %2126 = vperm.xlu0 %2125, %v1103
        %v2127 = vpop.permute.xlu0 %2126
        %2130 = vset.pattern.permute.xlu0 0
        %2131 = vperm.xlu0 %2130, %v1105
        %v2132 = vpop.permute.xlu0 %2131
        %2135 = vset.pattern.permute.xlu0 0
        %2136 = vperm.xlu0 %2135, %v1107
        %v2137 = vpop.permute.xlu0 %2136
        %2140 = vset.pattern.permute.xlu0 0
        %2141 = vperm.xlu0 %2140, %v1109
        %v2142 = vpop.permute.xlu0 %2141
        %2145 = vset.pattern.permute.xlu0 0
        %2146 = vperm.xlu0 %2145, %v1111
        %v2147 = vpop.permute.xlu0 %2146
        %2150 = vset.pattern.permute.xlu0 0
        %2151 = vperm.xlu0 %2150, %v1113
        %v2152 = vpop.permute.xlu0 %2151
        %2155 = vset.pattern.permute.xlu0 0
        %2156 = vperm.xlu0 %2155, %v1115
        %v2157 = vpop.permute.xlu0 %2156
        %2160 = vset.pattern.permute.xlu0 0
        %2161 = vperm.xlu0 %2160, %v1117
        %v2162 = vpop.permute.xlu0 %2161
        %2165 = vset.pattern.permute.xlu0 0
        %2166 = vperm.xlu0 %2165, %v1119
        %v2167 = vpop.permute.xlu0 %2166
        %2170 = vset.pattern.permute.xlu0 0
        %2171 = vperm.xlu0 %2170, %v1121
        %v2172 = vpop.permute.xlu0 %2171
        %2175 = vset.pattern.permute.xlu0 0
        %2176 = vperm.xlu0 %2175, %v1123
        %v2177 = vpop.permute.xlu0 %2176
        %2180 = vset.pattern.permute.xlu0 0
        %2181 = vperm.xlu0 %2180, %v1125
        %v2182 = vpop.permute.xlu0 %2181
        %v2184 = vmul.f32 %v2027, %v1992
        %v2185 = vmul.f32 %v2032, %v1993
        %v2186 = vmul.f32 %v2037, %v1994
        %v2187 = vmul.f32 %v2042, %v1995
        %v2188 = vmul.f32 %v2047, %v1996
        %v2189 = vmul.f32 %v2052, %v1997
        %v2190 = vmul.f32 %v2057, %v1998
        %v2191 = vmul.f32 %v2062, %v1999
        %v2192 = vmul.f32 %v2067, %v2000
        %v2193 = vmul.f32 %v2072, %v2001
        %v2194 = vmul.f32 %v2077, %v2002
        %v2195 = vmul.f32 %v2082, %v2003
        %v2196 = vmul.f32 %v2087, %v2004
        %v2197 = vmul.f32 %v2092, %v2005
        %v2198 = vmul.f32 %v2097, %v2006
        %v2199 = vmul.f32 %v2102, %v2007
        %v2200 = vmul.f32 %v2107, %v2008
        %v2201 = vmul.f32 %v2112, %v2009
        %v2202 = vmul.f32 %v2117, %v2010
        %v2203 = vmul.f32 %v2122, %v2011
        %v2204 = vmul.f32 %v2127, %v2012
        %v2205 = vmul.f32 %v2132, %v2013
        %v2206 = vmul.f32 %v2137, %v2014
        %v2207 = vmul.f32 %v2142, %v2015
        %v2208 = vmul.f32 %v2147, %v2016
        %v2209 = vmul.f32 %v2152, %v2017
        %v2210 = vmul.f32 %v2157, %v2018
        %v2211 = vmul.f32 %v2162, %v2019
        %v2212 = vmul.f32 %v2167, %v2020
        %v2213 = vmul.f32 %v2172, %v2021
        %v2214 = vmul.f32 %v2177, %v2022
        %v2215 = vmul.f32 %v2182, %v2023
        %v2216 = vadd.f32 %v2184, %v1866
        %v2217 = vadd.f32 %v2185, %v1869
        %v2218 = vadd.f32 %v2186, %v1874
        %v2219 = vadd.f32 %v2187, %v1877
        %v2220 = vadd.f32 %v2188, %v1882
        %v2221 = vadd.f32 %v2189, %v1885
        %v2222 = vadd.f32 %v2190, %v1890
        %v2223 = vadd.f32 %v2191, %v1893
        %v2224 = vadd.f32 %v2192, %v1898
        %v2225 = vadd.f32 %v2193, %v1901
        %v2226 = vadd.f32 %v2194, %v1906
        %v2227 = vadd.f32 %v2195, %v1909
        %v2228 = vadd.f32 %v2196, %v1914
        %v2229 = vadd.f32 %v2197, %v1917
        %v2230 = vadd.f32 %v2198, %v1922
        %v2231 = vadd.f32 %v2199, %v1925
        %v2232 = vadd.f32 %v2200, %v1930
        %v2233 = vadd.f32 %v2201, %v1933
        %v2234 = vadd.f32 %v2202, %v1938
        %v2235 = vadd.f32 %v2203, %v1941
        %v2236 = vadd.f32 %v2204, %v1946
        %v2237 = vadd.f32 %v2205, %v1949
        %v2238 = vadd.f32 %v2206, %v1954
        %v2239 = vadd.f32 %v2207, %v1957
        %v2240 = vadd.f32 %v2208, %v1962
        %v2241 = vadd.f32 %v2209, %v1965
        %v2242 = vadd.f32 %v2210, %v1970
        %v2243 = vadd.f32 %v2211, %v1973
        %v2244 = vadd.f32 %v2212, %v1978
        %v2245 = vadd.f32 %v2213, %v1981
        %v2246 = vadd.f32 %v2214, %v1986
        %v2247 = vadd.f32 %v2215, %v1989
        %2248 = vst [vmem:[#allocation5] sm:$0xff] %v2216
        %2249 = vst [vmem:[#allocation5 + $0x8] sm:$0xff] %v2217
        %2250 = vst [vmem:[#allocation5 + $0x10] sm:$0xff] %v2218
        %2251 = vst [vmem:[#allocation5 + $0x18] sm:$0xff] %v2219
        %2252 = vst [vmem:[#allocation5 + $0x20] sm:$0xff] %v2220
        %2253 = vst [vmem:[#allocation5 + $0x28] sm:$0xff] %v2221
        %2254 = vst [vmem:[#allocation5 + $0x30] sm:$0xff] %v2222
        %2255 = vst [vmem:[#allocation5 + $0x38] sm:$0xff] %v2223
        %2256 = vst [vmem:[#allocation5 + $0x40] sm:$0xff] %v2224
        %2257 = vst [vmem:[#allocation5 + $0x48] sm:$0xff] %v2225
        %2258 = vst [vmem:[#allocation5 + $0x50] sm:$0xff] %v2226
        %2259 = vst [vmem:[#allocation5 + $0x58] sm:$0xff] %v2227
        %2260 = vst [vmem:[#allocation5 + $0x60] sm:$0xff] %v2228
        %2261 = vst [vmem:[#allocation5 + $0x68] sm:$0xff] %v2229
        %2262 = vst [vmem:[#allocation5 + $0x70] sm:$0xff] %v2230
        %2263 = vst [vmem:[#allocation5 + $0x78] sm:$0xff] %v2231
        %2264 = vst [vmem:[#allocation5 + $0x80] sm:$0xff] %v2232
        %2265 = vst [vmem:[#allocation5 + $0x88] sm:$0xff] %v2233
        %2266 = vst [vmem:[#allocation5 + $0x90] sm:$0xff] %v2234
        %2267 = vst [vmem:[#allocation5 + $0x98] sm:$0xff] %v2235
        %2268 = vst [vmem:[#allocation5 + $0xa0] sm:$0xff] %v2236
        %2269 = vst [vmem:[#allocation5 + $0xa8] sm:$0xff] %v2237
        %2270 = vst [vmem:[#allocation5 + $0xb0] sm:$0xff] %v2238
        %2271 = vst [vmem:[#allocation5 + $0xb8] sm:$0xff] %v2239
        %2272 = vst [vmem:[#allocation5 + $0xc0] sm:$0xff] %v2240
        %2273 = vst [vmem:[#allocation5 + $0xc8] sm:$0xff] %v2241
        %2274 = vst [vmem:[#allocation5 + $0xd0] sm:$0xff] %v2242
        %2275 = vst [vmem:[#allocation5 + $0xd8] sm:$0xff] %v2243
        %2276 = vst [vmem:[#allocation5 + $0xe0] sm:$0xff] %v2244
        %2277 = vst [vmem:[#allocation5 + $0xe8] sm:$0xff] %v2245
        %2278 = vst [vmem:[#allocation5 + $0xf0] sm:$0xff] %v2246
        %2279 = vst [vmem:[#allocation5 + $0xf8] sm:$0xff] %v2247
        %2280 = vst.msk [vmem:[#allocation3] sm:$0xff] %vm1670, %v998
        %2281 = vst.msk [vmem:[#allocation3 + $0x8] sm:$0xff] %vm1670, %v999
        %2282 = vst.msk [vmem:[#allocation3 + $0x10] sm:$0xff] %vm1670, %v1000
        %2283 = vst.msk [vmem:[#allocation3 + $0x18] sm:$0xff] %vm1670, %v1001
        %2284 = vst.msk [vmem:[#allocation3 + $0x20] sm:$0xff] %vm1670, %v1002
        %2285 = vst.msk [vmem:[#allocation3 + $0x28] sm:$0xff] %vm1670, %v1003
        %2286 = vst.msk [vmem:[#allocation3 + $0x30] sm:$0xff] %vm1670, %v1004
        %2287 = vst.msk [vmem:[#allocation3 + $0x38] sm:$0xff] %vm1670, %v1005
        %2288 = vst.msk [vmem:[#allocation3 + $0x40] sm:$0xff] %vm1670, %v1006
        %2289 = vst.msk [vmem:[#allocation3 + $0x48] sm:$0xff] %vm1670, %v1007
        %2290 = vst.msk [vmem:[#allocation3 + $0x50] sm:$0xff] %vm1670, %v1008
        %2291 = vst.msk [vmem:[#allocation3 + $0x58] sm:$0xff] %vm1670, %v1009
        %2292 = vst.msk [vmem:[#allocation3 + $0x60] sm:$0xff] %vm1670, %v1010
        %2293 = vst.msk [vmem:[#allocation3 + $0x68] sm:$0xff] %vm1670, %v1011
        %2294 = vst.msk [vmem:[#allocation3 + $0x70] sm:$0xff] %vm1670, %v1012
        %2295 = vst.msk [vmem:[#allocation3 + $0x78] sm:$0xff] %vm1670, %v1013
        %2296 = vst.msk [vmem:[#allocation3 + $0x80] sm:$0xff] %vm1670, %v1014
        %2297 = vst.msk [vmem:[#allocation3 + $0x88] sm:$0xff] %vm1670, %v1015
        %2298 = vst.msk [vmem:[#allocation3 + $0x90] sm:$0xff] %vm1670, %v1016
        %2299 = vst.msk [vmem:[#allocation3 + $0x98] sm:$0xff] %vm1670, %v1017
        %2300 = vst.msk [vmem:[#allocation3 + $0xa0] sm:$0xff] %vm1670, %v1018
        %2301 = vst.msk [vmem:[#allocation3 + $0xa8] sm:$0xff] %vm1670, %v1019
        %2302 = vst.msk [vmem:[#allocation3 + $0xb0] sm:$0xff] %vm1670, %v1020
        %2303 = vst.msk [vmem:[#allocation3 + $0xb8] sm:$0xff] %vm1670, %v1021
        %2304 = vst.msk [vmem:[#allocation3 + $0xc0] sm:$0xff] %vm1670, %v1022
        %2305 = vst.msk [vmem:[#allocation3 + $0xc8] sm:$0xff] %vm1670, %v1023
        %2306 = vst.msk [vmem:[#allocation3 + $0xd0] sm:$0xff] %vm1670, %v1024
        %2307 = vst.msk [vmem:[#allocation3 + $0xd8] sm:$0xff] %vm1670, %v1025
        %2308 = vst.msk [vmem:[#allocation3 + $0xe0] sm:$0xff] %vm1670, %v1026
        %2309 = vst.msk [vmem:[#allocation3 + $0xe8] sm:$0xff] %vm1670, %v1027
        %2310 = vst.msk [vmem:[#allocation3 + $0xf0] sm:$0xff] %vm1670, %v1028
        %2311 = vst.msk [vmem:[#allocation3 + $0xf8] sm:$0xff] %vm1670, %v1029
        %p2312 = scmp.eq.s32.totalorder %s36, 1
        // Predicated region
        $region61: #{tpu_custom_call.1} parent=39 // pred_check
          %p2313 = pneg %p2312
        $region62: #{tpu_custom_call.1} parent=39 // pred_check_branch
          %2315 = sbr.rel (%p2313) target = $region64
        $region63: #{tpu_custom_call.1} parent=39 // pred_region
          %v2316 = vld [vmem:[#allocation4] sm:$0xff]
          %v2317 = vld [vmem:[#allocation4 + $0x8] sm:$0xff]
          %v2318 = vld [vmem:[#allocation4 + $0x10] sm:$0xff]
          %v2319 = vld [vmem:[#allocation4 + $0x18] sm:$0xff]
          %v2320 = vld [vmem:[#allocation4 + $0x20] sm:$0xff]
          %v2321 = vld [vmem:[#allocation4 + $0x28] sm:$0xff]
          %v2322 = vld [vmem:[#allocation4 + $0x30] sm:$0xff]
          %v2323 = vld [vmem:[#allocation4 + $0x38] sm:$0xff]
          %v2324 = vld [vmem:[#allocation4 + $0x40] sm:$0xff]
          %v2325 = vld [vmem:[#allocation4 + $0x48] sm:$0xff]
          %v2326 = vld [vmem:[#allocation4 + $0x50] sm:$0xff]
          %v2327 = vld [vmem:[#allocation4 + $0x58] sm:$0xff]
          %v2328 = vld [vmem:[#allocation4 + $0x60] sm:$0xff]
          %v2329 = vld [vmem:[#allocation4 + $0x68] sm:$0xff]
          %v2330 = vld [vmem:[#allocation4 + $0x70] sm:$0xff]
          %v2331 = vld [vmem:[#allocation4 + $0x78] sm:$0xff]
          %v2332 = vld [vmem:[#allocation4 + $0x80] sm:$0xff]
          %v2333 = vld [vmem:[#allocation4 + $0x88] sm:$0xff]
          %v2334 = vld [vmem:[#allocation4 + $0x90] sm:$0xff]
          %v2335 = vld [vmem:[#allocation4 + $0x98] sm:$0xff]
          %v2336 = vld [vmem:[#allocation4 + $0xa0] sm:$0xff]
          %v2337 = vld [vmem:[#allocation4 + $0xa8] sm:$0xff]
          %v2338 = vld [vmem:[#allocation4 + $0xb0] sm:$0xff]
          %v2339 = vld [vmem:[#allocation4 + $0xb8] sm:$0xff]
          %v2340 = vld [vmem:[#allocation4 + $0xc0] sm:$0xff]
          %v2341 = vld [vmem:[#allocation4 + $0xc8] sm:$0xff]
          %v2342 = vld [vmem:[#allocation4 + $0xd0] sm:$0xff]
          %v2343 = vld [vmem:[#allocation4 + $0xd8] sm:$0xff]
          %v2344 = vld [vmem:[#allocation4 + $0xe0] sm:$0xff]
          %v2345 = vld [vmem:[#allocation4 + $0xe8] sm:$0xff]
          %v2346 = vld [vmem:[#allocation4 + $0xf0] sm:$0xff]
          %v2347 = vld [vmem:[#allocation4 + $0xf8] sm:$0xff]
          %v2348 = vrcp.pop %v2316
          %v2349 = vmul.f32 1.0, %v2348
          %v2350 = vrcp.pop %v2317
          %v2351 = vmul.f32 1.0, %v2350
          %v2352 = vrcp.pop %v2318
          %v2353 = vmul.f32 1.0, %v2352
          %v2354 = vrcp.pop %v2319
          %v2355 = vmul.f32 1.0, %v2354
          %v2356 = vrcp.pop %v2320
          %v2357 = vmul.f32 1.0, %v2356
          %v2358 = vrcp.pop %v2321
          %v2359 = vmul.f32 1.0, %v2358
          %v2360 = vrcp.pop %v2322
          %v2361 = vmul.f32 1.0, %v2360
          %v2362 = vrcp.pop %v2323
          %v2363 = vmul.f32 1.0, %v2362
          %v2364 = vrcp.pop %v2324
          %v2365 = vmul.f32 1.0, %v2364
          %v2366 = vrcp.pop %v2325
          %v2367 = vmul.f32 1.0, %v2366
          %v2368 = vrcp.pop %v2326
          %v2369 = vmul.f32 1.0, %v2368
          %v2370 = vrcp.pop %v2327
          %v2371 = vmul.f32 1.0, %v2370
          %v2372 = vrcp.pop %v2328
          %v2373 = vmul.f32 1.0, %v2372
          %v2374 = vrcp.pop %v2329
          %v2375 = vmul.f32 1.0, %v2374
          %v2376 = vrcp.pop %v2330
          %v2377 = vmul.f32 1.0, %v2376
          %v2378 = vrcp.pop %v2331
          %v2379 = vmul.f32 1.0, %v2378
          %v2380 = vrcp.pop %v2332
          %v2381 = vmul.f32 1.0, %v2380
          %v2382 = vrcp.pop %v2333
          %v2383 = vmul.f32 1.0, %v2382
          %v2384 = vrcp.pop %v2334
          %v2385 = vmul.f32 1.0, %v2384
          %v2386 = vrcp.pop %v2335
          %v2387 = vmul.f32 1.0, %v2386
          %v2388 = vrcp.pop %v2336
          %v2389 = vmul.f32 1.0, %v2388
          %v2390 = vrcp.pop %v2337
          %v2391 = vmul.f32 1.0, %v2390
          %v2392 = vrcp.pop %v2338
          %v2393 = vmul.f32 1.0, %v2392
          %v2394 = vrcp.pop %v2339
          %v2395 = vmul.f32 1.0, %v2394
          %v2396 = vrcp.pop %v2340
          %v2397 = vmul.f32 1.0, %v2396
          %v2398 = vrcp.pop %v2341
          %v2399 = vmul.f32 1.0, %v2398
          %v2400 = vrcp.pop %v2342
          %v2401 = vmul.f32 1.0, %v2400
          %v2402 = vrcp.pop %v2343
          %v2403 = vmul.f32 1.0, %v2402
          %v2404 = vrcp.pop %v2344
          %v2405 = vmul.f32 1.0, %v2404
          %v2406 = vrcp.pop %v2345
          %v2407 = vmul.f32 1.0, %v2406
          %v2408 = vrcp.pop %v2346
          %v2409 = vmul.f32 1.0, %v2408
          %v2410 = vrcp.pop %v2347
          %v2411 = vmul.f32 1.0, %v2410
          %v2412 = vld [vmem:[#allocation5] sm:$0xff]
          %v2413 = vld [vmem:[#allocation5 + $0x8] sm:$0xff]
          %v2414 = vld [vmem:[#allocation5 + $0x10] sm:$0xff]
          %v2415 = vld [vmem:[#allocation5 + $0x18] sm:$0xff]
          %v2416 = vld [vmem:[#allocation5 + $0x20] sm:$0xff]
          %v2417 = vld [vmem:[#allocation5 + $0x28] sm:$0xff]
          %v2418 = vld [vmem:[#allocation5 + $0x30] sm:$0xff]
          %v2419 = vld [vmem:[#allocation5 + $0x38] sm:$0xff]
          %v2420 = vld [vmem:[#allocation5 + $0x40] sm:$0xff]
          %v2421 = vld [vmem:[#allocation5 + $0x48] sm:$0xff]
          %v2422 = vld [vmem:[#allocation5 + $0x50] sm:$0xff]
          %v2423 = vld [vmem:[#allocation5 + $0x58] sm:$0xff]
          %v2424 = vld [vmem:[#allocation5 + $0x60] sm:$0xff]
          %v2425 = vld [vmem:[#allocation5 + $0x68] sm:$0xff]
          %v2426 = vld [vmem:[#allocation5 + $0x70] sm:$0xff]
          %v2427 = vld [vmem:[#allocation5 + $0x78] sm:$0xff]
          %v2428 = vld [vmem:[#allocation5 + $0x80] sm:$0xff]
          %v2429 = vld [vmem:[#allocation5 + $0x88] sm:$0xff]
          %v2430 = vld [vmem:[#allocation5 + $0x90] sm:$0xff]
          %v2431 = vld [vmem:[#allocation5 + $0x98] sm:$0xff]
          %v2432 = vld [vmem:[#allocation5 + $0xa0] sm:$0xff]
          %v2433 = vld [vmem:[#allocation5 + $0xa8] sm:$0xff]
          %v2434 = vld [vmem:[#allocation5 + $0xb0] sm:$0xff]
          %v2435 = vld [vmem:[#allocation5 + $0xb8] sm:$0xff]
          %v2436 = vld [vmem:[#allocation5 + $0xc0] sm:$0xff]
          %v2437 = vld [vmem:[#allocation5 + $0xc8] sm:$0xff]
          %v2438 = vld [vmem:[#allocation5 + $0xd0] sm:$0xff]
          %v2439 = vld [vmem:[#allocation5 + $0xd8] sm:$0xff]
          %v2440 = vld [vmem:[#allocation5 + $0xe0] sm:$0xff]
          %v2441 = vld [vmem:[#allocation5 + $0xe8] sm:$0xff]
          %v2442 = vld [vmem:[#allocation5 + $0xf0] sm:$0xff]
          %v2443 = vld [vmem:[#allocation5 + $0xf8] sm:$0xff]
          %2445 = vset.pattern.permute.xlu0 0
          %2446 = vperm.xlu0 %2445, %v2349
          %v2447 = vpop.permute.xlu0 %2446
          %2450 = vset.pattern.permute.xlu0 0
          %2451 = vperm.xlu0 %2450, %v2351
          %v2452 = vpop.permute.xlu0 %2451
          %2455 = vset.pattern.permute.xlu0 0
          %2456 = vperm.xlu0 %2455, %v2353
          %v2457 = vpop.permute.xlu0 %2456
          %2460 = vset.pattern.permute.xlu0 0
          %2461 = vperm.xlu0 %2460, %v2355
          %v2462 = vpop.permute.xlu0 %2461
          %2465 = vset.pattern.permute.xlu0 0
          %2466 = vperm.xlu0 %2465, %v2357
          %v2467 = vpop.permute.xlu0 %2466
          %2470 = vset.pattern.permute.xlu0 0
          %2471 = vperm.xlu0 %2470, %v2359
          %v2472 = vpop.permute.xlu0 %2471
          %2475 = vset.pattern.permute.xlu0 0
          %2476 = vperm.xlu0 %2475, %v2361
          %v2477 = vpop.permute.xlu0 %2476
          %2480 = vset.pattern.permute.xlu0 0
          %2481 = vperm.xlu0 %2480, %v2363
          %v2482 = vpop.permute.xlu0 %2481
          %2485 = vset.pattern.permute.xlu0 0
          %2486 = vperm.xlu0 %2485, %v2365
          %v2487 = vpop.permute.xlu0 %2486
          %2490 = vset.pattern.permute.xlu0 0
          %2491 = vperm.xlu0 %2490, %v2367
          %v2492 = vpop.permute.xlu0 %2491
          %2495 = vset.pattern.permute.xlu0 0
          %2496 = vperm.xlu0 %2495, %v2369
          %v2497 = vpop.permute.xlu0 %2496
          %2500 = vset.pattern.permute.xlu0 0
          %2501 = vperm.xlu0 %2500, %v2371
          %v2502 = vpop.permute.xlu0 %2501
          %2505 = vset.pattern.permute.xlu0 0
          %2506 = vperm.xlu0 %2505, %v2373
          %v2507 = vpop.permute.xlu0 %2506
          %2510 = vset.pattern.permute.xlu0 0
          %2511 = vperm.xlu0 %2510, %v2375
          %v2512 = vpop.permute.xlu0 %2511
          %2515 = vset.pattern.permute.xlu0 0
          %2516 = vperm.xlu0 %2515, %v2377
          %v2517 = vpop.permute.xlu0 %2516
          %2520 = vset.pattern.permute.xlu0 0
          %2521 = vperm.xlu0 %2520, %v2379
          %v2522 = vpop.permute.xlu0 %2521
          %2525 = vset.pattern.permute.xlu0 0
          %2526 = vperm.xlu0 %2525, %v2381
          %v2527 = vpop.permute.xlu0 %2526
          %2530 = vset.pattern.permute.xlu0 0
          %2531 = vperm.xlu0 %2530, %v2383
          %v2532 = vpop.permute.xlu0 %2531
          %2535 = vset.pattern.permute.xlu0 0
          %2536 = vperm.xlu0 %2535, %v2385
          %v2537 = vpop.permute.xlu0 %2536
          %2540 = vset.pattern.permute.xlu0 0
          %2541 = vperm.xlu0 %2540, %v2387
          %v2542 = vpop.permute.xlu0 %2541
          %2545 = vset.pattern.permute.xlu0 0
          %2546 = vperm.xlu0 %2545, %v2389
          %v2547 = vpop.permute.xlu0 %2546
          %2550 = vset.pattern.permute.xlu0 0
          %2551 = vperm.xlu0 %2550, %v2391
          %v2552 = vpop.permute.xlu0 %2551
          %2555 = vset.pattern.permute.xlu0 0
          %2556 = vperm.xlu0 %2555, %v2393
          %v2557 = vpop.permute.xlu0 %2556
          %2560 = vset.pattern.permute.xlu0 0
          %2561 = vperm.xlu0 %2560, %v2395
          %v2562 = vpop.permute.xlu0 %2561
          %2565 = vset.pattern.permute.xlu0 0
          %2566 = vperm.xlu0 %2565, %v2397
          %v2567 = vpop.permute.xlu0 %2566
          %2570 = vset.pattern.permute.xlu0 0
          %2571 = vperm.xlu0 %2570, %v2399
          %v2572 = vpop.permute.xlu0 %2571
          %2575 = vset.pattern.permute.xlu0 0
          %2576 = vperm.xlu0 %2575, %v2401
          %v2577 = vpop.permute.xlu0 %2576
          %2580 = vset.pattern.permute.xlu0 0
          %2581 = vperm.xlu0 %2580, %v2403
          %v2582 = vpop.permute.xlu0 %2581
          %2585 = vset.pattern.permute.xlu0 0
          %2586 = vperm.xlu0 %2585, %v2405
          %v2587 = vpop.permute.xlu0 %2586
          %2590 = vset.pattern.permute.xlu0 0
          %2591 = vperm.xlu0 %2590, %v2407
          %v2592 = vpop.permute.xlu0 %2591
          %2595 = vset.pattern.permute.xlu0 0
          %2596 = vperm.xlu0 %2595, %v2409
          %v2597 = vpop.permute.xlu0 %2596
          %2600 = vset.pattern.permute.xlu0 0
          %2601 = vperm.xlu0 %2600, %v2411
          %v2602 = vpop.permute.xlu0 %2601
          %v2604 = vmul.f32 %v2412, %v2447
          %v2605 = vmul.f32 %v2413, %v2452
          %v2606 = vmul.f32 %v2414, %v2457
          %v2607 = vmul.f32 %v2415, %v2462
          %v2608 = vmul.f32 %v2416, %v2467
          %v2609 = vmul.f32 %v2417, %v2472
          %v2610 = vmul.f32 %v2418, %v2477
          %v2611 = vmul.f32 %v2419, %v2482
          %v2612 = vmul.f32 %v2420, %v2487
          %v2613 = vmul.f32 %v2421, %v2492
          %v2614 = vmul.f32 %v2422, %v2497
          %v2615 = vmul.f32 %v2423, %v2502
          %v2616 = vmul.f32 %v2424, %v2507
          %v2617 = vmul.f32 %v2425, %v2512
          %v2618 = vmul.f32 %v2426, %v2517
          %v2619 = vmul.f32 %v2427, %v2522
          %v2620 = vmul.f32 %v2428, %v2527
          %v2621 = vmul.f32 %v2429, %v2532
          %v2622 = vmul.f32 %v2430, %v2537
          %v2623 = vmul.f32 %v2431, %v2542
          %v2624 = vmul.f32 %v2432, %v2547
          %v2625 = vmul.f32 %v2433, %v2552
          %v2626 = vmul.f32 %v2434, %v2557
          %v2627 = vmul.f32 %v2435, %v2562
          %v2628 = vmul.f32 %v2436, %v2567
          %v2629 = vmul.f32 %v2437, %v2572
          %v2630 = vmul.f32 %v2438, %v2577
          %v2631 = vmul.f32 %v2439, %v2582
          %v2632 = vmul.f32 %v2440, %v2587
          %v2633 = vmul.f32 %v2441, %v2592
          %v2634 = vmul.f32 %v2442, %v2597
          %v2635 = vmul.f32 %v2443, %v2602
          %s2636 = sld [smem:[#allocation6]]
          %2637 = vxpose.xlu0.b32.start [1/16] %v2604, 128
          %2638 = vxpose.xlu0.b32.cont [2/16] %v2605, 128
          %2639 = vxpose.xlu0.b32.cont [3/16] %v2606, 128
          %2640 = vxpose.xlu0.b32.cont [4/16] %v2607, 128
          %2641 = vxpose.xlu0.b32.cont [5/16] %v2608, 128
          %2642 = vxpose.xlu0.b32.cont [6/16] %v2609, 128
          %2643 = vxpose.xlu0.b32.cont [7/16] %v2610, 128
          %2644 = vxpose.xlu0.b32.cont [8/16] %v2611, 128
          %2645 = vxpose.xlu0.b32.cont [9/16] %v2612, 128
          %2646 = vxpose.xlu0.b32.cont [10/16] %v2613, 128
          %2647 = vxpose.xlu0.b32.cont [11/16] %v2614, 128
          %2648 = vxpose.xlu0.b32.cont [12/16] %v2615, 128
          %2649 = vxpose.xlu0.b32.cont [13/16] %v2616, 128
          %2650 = vxpose.xlu0.b32.cont [14/16] %v2617, 128
          %2651 = vxpose.xlu0.b32.cont [15/16] %v2618, 128
          %2652 = vxpose.xlu0.b32.end [16/16] %v2619, 128
          %v2653 = vpop.trf.xlu0
          %v2654 = vpop.trf.xlu0
          %v2655 = vpop.trf.xlu0
          %v2656 = vpop.trf.xlu0
          %v2657 = vpop.trf.xlu0
          %v2658 = vpop.trf.xlu0
          %v2659 = vpop.trf.xlu0
          %v2660 = vpop.trf.xlu0
          %v2661 = vpop.trf.xlu0
          %v2662 = vpop.trf.xlu0
          %v2663 = vpop.trf.xlu0
          %v2664 = vpop.trf.xlu0
          %v2665 = vpop.trf.xlu0
          %v2666 = vpop.trf.xlu0
          %v2667 = vpop.trf.xlu0
          %v2668 = vpop.trf.xlu0
          %2669 = vxpose.xlu0.b32.start [1/16] %v2620, 128
          %2670 = vxpose.xlu0.b32.cont [2/16] %v2621, 128
          %2671 = vxpose.xlu0.b32.cont [3/16] %v2622, 128
          %2672 = vxpose.xlu0.b32.cont [4/16] %v2623, 128
          %2673 = vxpose.xlu0.b32.cont [5/16] %v2624, 128
          %2674 = vxpose.xlu0.b32.cont [6/16] %v2625, 128
          %2675 = vxpose.xlu0.b32.cont [7/16] %v2626, 128
          %2676 = vxpose.xlu0.b32.cont [8/16] %v2627, 128
          %2677 = vxpose.xlu0.b32.cont [9/16] %v2628, 128
          %2678 = vxpose.xlu0.b32.cont [10/16] %v2629, 128
          %2679 = vxpose.xlu0.b32.cont [11/16] %v2630, 128
          %2680 = vxpose.xlu0.b32.cont [12/16] %v2631, 128
          %2681 = vxpose.xlu0.b32.cont [13/16] %v2632, 128
          %2682 = vxpose.xlu0.b32.cont [14/16] %v2633, 128
          %2683 = vxpose.xlu0.b32.cont [15/16] %v2634, 128
          %2684 = vxpose.xlu0.b32.end [16/16] %v2635, 128
          %v2685 = vpop.trf.xlu0
          %v2686 = vpop.trf.xlu0
          %v2687 = vpop.trf.xlu0
          %v2688 = vpop.trf.xlu0
          %v2689 = vpop.trf.xlu0
          %v2690 = vpop.trf.xlu0
          %v2691 = vpop.trf.xlu0
          %v2692 = vpop.trf.xlu0
          %v2693 = vpop.trf.xlu0
          %v2694 = vpop.trf.xlu0
          %v2695 = vpop.trf.xlu0
          %v2696 = vpop.trf.xlu0
          %v2697 = vpop.trf.xlu0
          %v2698 = vpop.trf.xlu0
          %v2699 = vpop.trf.xlu0
          %v2700 = vpop.trf.xlu0
          %v2701 = vstv %s2636
          %v2702 = vmul.f32 %v2701, %v2653
          %v2703 = vmul.f32 %v2701, %v2685
          %v2704 = vmul.f32 %v2701, %v2654
          %v2705 = vmul.f32 %v2701, %v2686
          %v2706 = vmul.f32 %v2701, %v2655
          %v2707 = vmul.f32 %v2701, %v2687
          %v2708 = vmul.f32 %v2701, %v2656
          %v2709 = vmul.f32 %v2701, %v2688
          %v2710 = vmul.f32 %v2701, %v2657
          %v2711 = vmul.f32 %v2701, %v2689
          %v2712 = vmul.f32 %v2701, %v2658
          %v2713 = vmul.f32 %v2701, %v2690
          %v2714 = vmul.f32 %v2701, %v2659
          %v2715 = vmul.f32 %v2701, %v2691
          %v2716 = vmul.f32 %v2701, %v2660
          %v2717 = vmul.f32 %v2701, %v2692
          %v2718 = vmul.f32 %v2701, %v2661
          %v2719 = vmul.f32 %v2701, %v2693
          %v2720 = vmul.f32 %v2701, %v2662
          %v2721 = vmul.f32 %v2701, %v2694
          %v2722 = vmul.f32 %v2701, %v2663
          %v2723 = vmul.f32 %v2701, %v2695
          %v2724 = vmul.f32 %v2701, %v2664
          %v2725 = vmul.f32 %v2701, %v2696
          %v2726 = vmul.f32 %v2701, %v2665
          %v2727 = vmul.f32 %v2701, %v2697
          %v2728 = vmul.f32 %v2701, %v2666
          %v2729 = vmul.f32 %v2701, %v2698
          %v2730 = vmul.f32 %v2701, %v2667
          %v2731 = vmul.f32 %v2701, %v2699
          %v2732 = vmul.f32 %v2701, %v2668
          %v2733 = vmul.f32 %v2701, %v2700
          %v2734 = vld [vmem:[%s356] sm:$0xff]
          %v2735 = vld [vmem:[%s356 + $0x8] sm:$0xff]
          %v2736 = vld [vmem:[%s356 + $0x10] sm:$0xff]
          %v2737 = vld [vmem:[%s356 + $0x18] sm:$0xff]
          %v2738 = vld [vmem:[%s356 + $0x20] sm:$0xff]
          %v2739 = vld [vmem:[%s356 + $0x28] sm:$0xff]
          %v2740 = vld [vmem:[%s356 + $0x30] sm:$0xff]
          %v2741 = vld [vmem:[%s356 + $0x38] sm:$0xff]
          %v2742 = vld [vmem:[%s356 + $0x40] sm:$0xff]
          %v2743 = vld [vmem:[%s356 + $0x48] sm:$0xff]
          %v2744 = vld [vmem:[%s356 + $0x50] sm:$0xff]
          %v2745 = vld [vmem:[%s356 + $0x58] sm:$0xff]
          %v2746 = vld [vmem:[%s356 + $0x60] sm:$0xff]
          %v2747 = vld [vmem:[%s356 + $0x68] sm:$0xff]
          %v2748 = vld [vmem:[%s356 + $0x70] sm:$0xff]
          %v2749 = vld [vmem:[%s356 + $0x78] sm:$0xff]
          %v2750 = vld [vmem:[%s356 + $0x80] sm:$0xff]
          %v2751 = vld [vmem:[%s356 + $0x88] sm:$0xff]
          %v2752 = vld [vmem:[%s356 + $0x90] sm:$0xff]
          %v2753 = vld [vmem:[%s356 + $0x98] sm:$0xff]
          %v2754 = vld [vmem:[%s356 + $0xa0] sm:$0xff]
          %v2755 = vld [vmem:[%s356 + $0xa8] sm:$0xff]
          %v2756 = vld [vmem:[%s356 + $0xb0] sm:$0xff]
          %v2757 = vld [vmem:[%s356 + $0xb8] sm:$0xff]
          %v2758 = vld [vmem:[%s356 + $0xc0] sm:$0xff]
          %v2759 = vld [vmem:[%s356 + $0xc8] sm:$0xff]
          %v2760 = vld [vmem:[%s356 + $0xd0] sm:$0xff]
          %v2761 = vld [vmem:[%s356 + $0xd8] sm:$0xff]
          %v2762 = vld [vmem:[%s356 + $0xe0] sm:$0xff]
          %v2763 = vld [vmem:[%s356 + $0xe8] sm:$0xff]
          %v2764 = vld [vmem:[%s356 + $0xf0] sm:$0xff]
          %v2765 = vld [vmem:[%s356 + $0xf8] sm:$0xff]
          %v2766 = vadd.f32 %v2702, %v2734
          %v2767 = vadd.f32 %v2703, %v2735
          %v2768 = vadd.f32 %v2704, %v2736
          %v2769 = vadd.f32 %v2705, %v2737
          %v2770 = vadd.f32 %v2706, %v2738
          %v2771 = vadd.f32 %v2707, %v2739
          %v2772 = vadd.f32 %v2708, %v2740
          %v2773 = vadd.f32 %v2709, %v2741
          %v2774 = vadd.f32 %v2710, %v2742
          %v2775 = vadd.f32 %v2711, %v2743
          %v2776 = vadd.f32 %v2712, %v2744
          %v2777 = vadd.f32 %v2713, %v2745
          %v2778 = vadd.f32 %v2714, %v2746
          %v2779 = vadd.f32 %v2715, %v2747
          %v2780 = vadd.f32 %v2716, %v2748
          %v2781 = vadd.f32 %v2717, %v2749
          %v2782 = vadd.f32 %v2718, %v2750
          %v2783 = vadd.f32 %v2719, %v2751
          %v2784 = vadd.f32 %v2720, %v2752
          %v2785 = vadd.f32 %v2721, %v2753
          %v2786 = vadd.f32 %v2722, %v2754
          %v2787 = vadd.f32 %v2723, %v2755
          %v2788 = vadd.f32 %v2724, %v2756
          %v2789 = vadd.f32 %v2725, %v2757
          %v2790 = vadd.f32 %v2726, %v2758
          %v2791 = vadd.f32 %v2727, %v2759
          %v2792 = vadd.f32 %v2728, %v2760
          %v2793 = vadd.f32 %v2729, %v2761
          %v2794 = vadd.f32 %v2730, %v2762
          %v2795 = vadd.f32 %v2731, %v2763
          %v2796 = vadd.f32 %v2732, %v2764
          %v2797 = vadd.f32 %v2733, %v2765
          %2798 = vst [vmem:[%s397] sm:$0xff] %v2766
          %2799 = vst [vmem:[%s397 + $0x8] sm:$0xff] %v2767
          %2800 = vst [vmem:[%s397 + $0x10] sm:$0xff] %v2768
          %2801 = vst [vmem:[%s397 + $0x18] sm:$0xff] %v2769
          %2802 = vst [vmem:[%s397 + $0x20] sm:$0xff] %v2770
          %2803 = vst [vmem:[%s397 + $0x28] sm:$0xff] %v2771
          %2804 = vst [vmem:[%s397 + $0x30] sm:$0xff] %v2772
          %2805 = vst [vmem:[%s397 + $0x38] sm:$0xff] %v2773
          %2806 = vst [vmem:[%s397 + $0x40] sm:$0xff] %v2774
          %2807 = vst [vmem:[%s397 + $0x48] sm:$0xff] %v2775
          %2808 = vst [vmem:[%s397 + $0x50] sm:$0xff] %v2776
          %2809 = vst [vmem:[%s397 + $0x58] sm:$0xff] %v2777
          %2810 = vst [vmem:[%s397 + $0x60] sm:$0xff] %v2778
          %2811 = vst [vmem:[%s397 + $0x68] sm:$0xff] %v2779
          %2812 = vst [vmem:[%s397 + $0x70] sm:$0xff] %v2780
          %2813 = vst [vmem:[%s397 + $0x78] sm:$0xff] %v2781
          %2814 = vst [vmem:[%s397 + $0x80] sm:$0xff] %v2782
          %2815 = vst [vmem:[%s397 + $0x88] sm:$0xff] %v2783
          %2816 = vst [vmem:[%s397 + $0x90] sm:$0xff] %v2784
          %2817 = vst [vmem:[%s397 + $0x98] sm:$0xff] %v2785
          %2818 = vst [vmem:[%s397 + $0xa0] sm:$0xff] %v2786
          %2819 = vst [vmem:[%s397 + $0xa8] sm:$0xff] %v2787
          %2820 = vst [vmem:[%s397 + $0xb0] sm:$0xff] %v2788
          %2821 = vst [vmem:[%s397 + $0xb8] sm:$0xff] %v2789
          %2822 = vst [vmem:[%s397 + $0xc0] sm:$0xff] %v2790
          %2823 = vst [vmem:[%s397 + $0xc8] sm:$0xff] %v2791
          %2824 = vst [vmem:[%s397 + $0xd0] sm:$0xff] %v2792
          %2825 = vst [vmem:[%s397 + $0xd8] sm:$0xff] %v2793
          %2826 = vst [vmem:[%s397 + $0xe0] sm:$0xff] %v2794
          %2827 = vst [vmem:[%s397 + $0xe8] sm:$0xff] %v2795
          %2828 = vst [vmem:[%s397 + $0xf0] sm:$0xff] %v2796
          %2829 = vst [vmem:[%s397 + $0xf8] sm:$0xff] %v2797
        $region64: #{tpu_custom_call.1} parent=39 // pred_fallthru
          _
        %s2830 = sand.u32 %s191, 1
        %s2831 = scalar_lea.sflag [#allocation9], %s2830
        %s2832 = sand.u32 %s191, 1
        %s2833 = smul.addr %s2832, 256
        %s2834 = scalar_lea.vmem [#allocation15], %s2833
        // Predicated region
        $region65: #{tpu_custom_call.1} parent=39 // pred_check
          %p2835 = pneg %p201
        $region66: #{tpu_custom_call.1} parent=39 // pred_check_branch
          %2837 = sbr.rel (%p2835) target = $region68
        $region67: #{tpu_custom_call.1} parent=39 // pred_region
          %s2838 = smul.u32 2, %s35
          %s2840 = ssub.s32 4096, 4096
          %2841 = vsyncadd %s2831, %s2840
          %s2842 = smul.addr %s34, 64
          %s2843 = sadd.s32 %s2838, %s2842
          %s2844 = smul.addr %s2843, 128
          %s2845 = scalar_lea.hbm %s5, %s2844
          %s2846 = sshll.u32 %s2834, 4
          %s2847 = int_to_ptr.vmem [resolvable:$true] %s2846
          %2852 = dma.vmem_to_hbm [thread:$0]  %s2847, 4096, %s2845, %s2831, 256, 512, 16
        $region68: #{tpu_custom_call.1} parent=39 // pred_fallthru
          _
      $region40: #{tpu_custom_call.1} parent=5 // pred_fallthru
        _
      %p2853 = scmp.le.s32.totalorder 2, %s24
      // Predicated region
      $region69: #{tpu_custom_call.1} parent=5 // pred_check
        %p2854 = pneg %p2853
      $region70: #{tpu_custom_call.1} parent=5 // pred_check_branch
        %2856 = sbr.rel (%p2854) target = $region72
      $region71: #{tpu_custom_call.1} parent=5 // pred_region
        %s2857 = ssub.s32 %s24, 2
        // Predicated region
        $region73: #{tpu_custom_call.1} parent=71 // pred_check
          %p2858 = pneg %p207
        $region74: #{tpu_custom_call.1} parent=71 // pred_check_branch
          %2860 = sbr.rel (%p2858) target = $region76
        $region75: #{tpu_custom_call.1} parent=71 // pred_region
          %s2861 = sand.u32 %s192, 1
          %s2862 = scalar_lea.sflag [#allocation9], %s2861
          %s2863 = sand.u32 %s192, 1
          %s2864 = smul.addr %s2863, 256
          %s2865 = scalar_lea.vmem [#allocation15], %s2864
          %2866 = dma.done %s2862, 4096
        $region76: #{tpu_custom_call.1} parent=71 // pred_fallthru
          _
      $region72: #{tpu_custom_call.1} parent=5 // pred_fallthru
        _
    $region6: #{tpu_custom_call.1} parent=1 // loop_footer
      %s28 = sadd.s32 1, %s24
    $region7: #{tpu_custom_call.1} parent=1 // loop_footer_branch
      %23 = sbr.rel target = $region3
    $region8: #{tpu_custom_call.1} parent=1 // loop_exit
      _
    %2867 = vsyncpa [#allocation8], 1
    %s2868 = scalar_lea.sflag [#allocation8], 1
    %2869 = vsyncpa %s2868, 1
    %2870 = vsyncpa [#allocation11], 1
    %s2871 = scalar_lea.sflag [#allocation11], 1
    %2872 = vsyncpa %s2871, 1
    %2873 = vsyncpa [#allocation14], 1
    %s2874 = scalar_lea.sflag [#allocation14], 1
    %2875 = vsyncpa %s2874, 1
    %2876 = vsyncpa [#allocation9], 1
    %s2877 = scalar_lea.sflag [#allocation9], 1
    %2878 = vsyncpa %s2877, 1

</llo_original>
